<compile_context>
chip_gen: v5e
topology: v5e:2x2
jax: 0.10.0
libtpu: 0.0.40
codegen_flags: <defaults>
</compile_context>

<pallas_src>
import numpy as np
import jax
import jax.numpy as jnp
from jax import lax
from jax.experimental import pallas as pl
from jax.experimental.pallas import tpu as pltpu


# ----------------------------- helpers ------------------------------------- #

def _round_up(x, m):
    return ((x + m - 1) // m) * m


def _tensorcores_per_chip():
    """Best-effort TensorCore count per chip.  Dual-TC generations (v7x, v4/v5p
    megacore) want a balanced multi-block grid; single-TC (v5e/v6e) want the
    fewest grid steps."""
    try:
        kind = jax.devices()[0].device_kind.lower()
    except Exception:
        return 1
    return 2 if any(t in kind for t in ("v7", "v5p", "v4")) else 1


def _pick_k_tiling(K, n_l_blocks, num_cores):
    """Choose (tk, K_pad) for the proposal axis (output lane dim).

    * K % 128 == 0 : tile with a multiple of 128 (no padding).
    * small ragged K: one full-extent block (no padding, no output slice).
    * large ragged K: rare fallback -- pad to a multiple of 128 (sliced off in
      the wrapper).
    """
    if K % 128 != 0:
        if K <= 1024:
            return K, K                       # single full-extent block
        K_pad = _round_up(K, 128)             # rare fallback: pad + slice
    else:
        K_pad = K
    cands = [c for c in (1024, 512, 384, 256, 128) if c <= K_pad and K_pad % c == 0]
    if not cands:
        cands = [K_pad]
    if num_cores > 1:
        # Dual-TC: prefer the largest tile giving a balanced (>= #cores, divisible)
        # block count so both TensorCores get disjoint, equal HBM streams.
        for c in cands:
            n = n_l_blocks * (K_pad // c)
            if n >= num_cores and n % num_cores == 0:
                return c, K_pad
        for c in cands:
            if n_l_blocks * (K_pad // c) >= num_cores:
                return c, K_pad
    # Single TC (v5e/v6e): fewest grid steps -> largest tile.
    return cands[0], K_pad


# ----------------------------- Pallas kernel ------------------------------- #

def _proposal_mlp_kernel(x_ref, w1_ref, b1_ref, w2_ref, b2_ref, w3_ref, b3_ref, o_ref):
    # x_ref : (tk, B, 256) f32   -- native-layout input slab for one decoder layer
    # o_ref : (B, out_dim, tk) f32 -- NCW conv-stack output slab
    tk = x_ref.shape[0]
    nb = x_ref.shape[1]
    w1 = w1_ref[...]                       # (128, 256) bf16, BN1 scale folded in
    w2 = w2_ref[...]                       # (128, 128) bf16, BN2 scale folded in
    w3 = w3_ref[...]                       # (out_dim, 128) bf16
    # Hoist the per-channel shift broadcasts above the batch loop
    # (JAX does not CSE broadcast_in_dim).
    b1 = jnp.broadcast_to(b1_ref[...], (w1.shape[0], tk))
    b2 = jnp.broadcast_to(b2_ref[...], (w2.shape[0], tk))
    b3 = jnp.broadcast_to(b3_ref[...], (w3.shape[0], tk))

    def body(b, carry):
        # One (tk, 256) slab of a single (layer, batch) pair; cast to bf16 only
        # at the MXU inputs (f32 stays in HBM -> half the input-side traffic of
        # a separate transpose+cast pass).
        x = x_ref[:, b, :].astype(jnp.bfloat16)                          # (tk, 256)
        # Conv1d(256->128, 1, bias=False) + folded BN + ReLU:  W1 @ x^T (NT dot,
        # channel axis contracted directly, no explicit transpose).
        h = lax.dot_general(w1, x, (((1,), (1,)), ((), ())),
                            preferred_element_type=jnp.float32)          # (128, tk)
        h = jnp.maximum(h + b1, 0.0)
        # Conv1d(128->128, 1, bias=False) + folded BN + ReLU
        h = jnp.dot(w2, h.astype(jnp.bfloat16), preferred_element_type=jnp.float32)
        h = jnp.maximum(h + b2, 0.0)
        # Conv1d(128->out_dim, 1) with bias (exactly out_dim rows, no padding)
        o = jnp.dot(w3, h.astype(jnp.bfloat16), preferred_element_type=jnp.float32)
        o_ref[b] = (o + b3).astype(o_ref.dtype)
        return carry

    lax.fori_loop(0, nb, body, 0, unroll=True)


def proposal_mlp(features, params, out_dim, num_cores=1):
    """features: (L, K, B, 256) float -- the module input in its NATIVE layout.

    Returns (L, B, out_dim, K) float32, i.e. the torch Conv1d stack output
    (L*B, out_dim, K) viewed as (L, B, out_dim, K).  The reference module's
    permute(0,2,3,1) + reshape is folded into the input BlockSpec index map.
    """
    L, K, B, C = features.shape
    w1, b1 = params['w1'], params['b1']
    w2, b2 = params['w2'], params['b2']
    w3, b3 = params['w3'], params['b3']
    c1, c2 = w1.shape[0], w2.shape[0]

    tk, K_pad = _pick_k_tiling(K, L, num_cores)
    x = features
    if K_pad != K:
        # Rare fallback (large, non-128-multiple proposal count).
        x = jnp.pad(x, ((0, 0), (0, K_pad - K), (0, 0), (0, 0)))

    const = lambda l, j: (0, 0)
    out = pl.pallas_call(
        _proposal_mlp_kernel,
        out_shape=jax.ShapeDtypeStruct((L, B, out_dim, K_pad), jnp.float32),
        grid_spec=pltpu.PrefetchScalarGridSpec(
            num_scalar_prefetch=0,
            grid=(L, K_pad // tk),
            in_specs=[
                # Native-layout input block: 1 layer x tk proposals x all B x all C.
                pl.BlockSpec((None, tk, B, C), lambda l, j: (l, j, 0, 0)),
                # Constant weights / shifts: block index never changes -> single buffer.
                pl.BlockSpec((c1, C), const, pipeline_mode=pl.Buffered(1)),
                pl.BlockSpec((c1, 1), const, pipeline_mode=pl.Buffered(1)),
                pl.BlockSpec((c2, c1), const, pipeline_mode=pl.Buffered(1)),
                pl.BlockSpec((c2, 1), const, pipeline_mode=pl.Buffered(1)),
                pl.BlockSpec((out_dim, c2), const, pipeline_mode=pl.Buffered(1)),
                pl.BlockSpec((out_dim, 1), const, pipeline_mode=pl.Buffered(1)),
            ],
            out_specs=pl.BlockSpec((None, B, out_dim, tk), lambda l, j: (l, 0, 0, j)),
        ),
        compiler_params=pltpu.CompilerParams(
            dimension_semantics=("parallel", "parallel")),
    )(x, w1, b1, w2, b2, w3, b3)
    if K_pad != K:
        out = out[..., :K]      # drop padded proposal columns (carry garbage)
    return out


# Plain-JAX reference mirroring the kernel math (bf16 MXU inputs, f32 accumulate),
# used for the numerical self-check of the Pallas data routing.
def _ref_mlp(features, params):
    x = features.astype(jnp.bfloat16)                                       # (L,K,B,C)
    h = jnp.einsum('lkbc,oc->lbok', x, params['w1'],
                   preferred_element_type=jnp.float32)
    h = jnp.maximum(h + params['b1'][None, None], 0.0)
    h = jnp.einsum('lbck,oc->lbok', h.astype(jnp.bfloat16), params['w2'],
                   preferred_element_type=jnp.float32)
    h = jnp.maximum(h + params['b2'][None, None], 0.0)
    o = jnp.einsum('lbck,oc->lbok', h.astype(jnp.bfloat16), params['w3'],
                   preferred_element_type=jnp.float32)
    return o + params['b3'][None, None]                                     # (L,B,out,K)


# --------------------------- Module (JAX wrapper) --------------------------- #

class ProposalModuleJax:
    def __init__(self, num_class, num_heading_bin, num_size_cluster, mean_size_arr,
                 num_proposal, sampling, seed_feat_dim=256, key=None):
        self.num_class = num_class
        self.num_heading_bin = num_heading_bin
        self.num_size_cluster = num_size_cluster
        self.mean_size_arr = jnp.asarray(mean_size_arr, jnp.float32)
        self.num_proposal = num_proposal
        self.sampling = sampling
        self.seed_feat_dim = seed_feat_dim
        out_dim = 2 + 3 + num_heading_bin * 2 + num_size_cluster * 4 + num_class + 128
        self.out_dim = out_dim
        self._num_cores = _tensorcores_per_chip()

        key = jax.random.PRNGKey(0) if key is None else key
        ks = jax.random.split(key, 12)
        eps = 1e-5

        # Conv1d weights (Cout, Cin) (kernel size 1 squeezed away)
        w1 = jax.random.normal(ks[0], (128, seed_feat_dim), jnp.float32) * 0.05
        w2 = jax.random.normal(ks[1], (128, 128), jnp.float32) * 0.05
        w3 = jax.random.normal(ks[2], (out_dim, 128), jnp.float32) * 0.05
        b3 = jax.random.normal(ks[3], (out_dim,), jnp.float32) * 0.05

        # BatchNorm1d params + running stats (eval-mode semantics).
        g1 = jax.random.uniform(ks[4], (128,), jnp.float32, 0.5, 1.5)
        be1 = jax.random.normal(ks[5], (128,), jnp.float32) * 0.05
        rm1 = jax.random.normal(ks[6], (128,), jnp.float32) * 0.05
        rv1 = jax.random.uniform(ks[7], (128,), jnp.float32, 0.5, 1.5)
        g2 = jax.random.uniform(ks[8], (128,), jnp.float32, 0.5, 1.5)
        be2 = jax.random.normal(ks[9], (128,), jnp.float32) * 0.05
        rm2 = jax.random.normal(ks[10], (128,), jnp.float32) * 0.05
        rv2 = jax.random.uniform(ks[11], (128,), jnp.float32, 0.5, 1.5)

        # Fold BN scale into the conv weights; keep only the shift as a bias.
        s1 = g1 / jnp.sqrt(rv1 + eps)
        sh1 = be1 - rm1 * s1
        s2 = g2 / jnp.sqrt(rv2 + eps)
        sh2 = be2 - rm2 * s2

        self.params = dict(
            w1=(w1 * s1[:, None]).astype(jnp.bfloat16),        # (128, 256)
            b1=sh1[:, None].astype(jnp.float32),               # (128, 1)
            w2=(w2 * s2[:, None]).astype(jnp.bfloat16),        # (128, 128)
            b2=sh2[:, None].astype(jnp.float32),               # (128, 1)
            w3=w3.astype(jnp.bfloat16),                        # (out_dim, 128) -- exact, unpadded
            b3=b3[:, None].astype(jnp.float32),                # (out_dim, 1)
        )

    # ------------------------------------------------------------------ #
    def __call__(self, xyz, features, data_dict):
        """Eval-mode forward.
        xyz:      (batch, num_proposal, 3)
        features: (num_layers, num_proposal, batch, 256), so that
                  features.permute(0,2,3,1) == (num_layers, batch, 256, num_proposal)
                  exactly as in the PyTorch module.
        """
        num_layers, num_proposal, batch, _ = features.shape
        # The module's permute(0,2,3,1) + reshape(L*B, 256, K) are folded into the
        # kernel's input BlockSpec; no transposed/cast copy of `features` is made.
        net_ncw = proposal_mlp(features, self.params, self.out_dim, self._num_cores)
        # net_ncw == torch conv output (L*B, out_dim, K) viewed as (L, B, out_dim, K).
        # Reproduce torch's *raw* reshape of the NCW conv output verbatim (it
        # interleaves the channel and proposal axes, exactly as the reference code).
        net = net_ncw.reshape(num_layers, batch, num_proposal, -1)

        # TODO(synk): training-mode per-decoder-layer outputs are not implemented
        # (eval path only, matching the original else-branch).
        data_dict = self.decode_scores(
            net[num_layers - 1].reshape(batch, num_proposal, -1), data_dict, xyz,
            self.num_class, self.num_heading_bin, self.num_size_cluster, self.mean_size_arr)
        data_dict['num_decoder_layers'] = num_layers
        return data_dict

    # ------------------------------------------------------------------ #
    def decode_scores(self, net, data_dict, xyz, num_class, num_heading_bin,
                      num_size_cluster, mean_size_arr):
        batch_size, num_proposal, _ = net.shape
        nh, ns = num_heading_bin, num_size_cluster
        objectness_scores = net[:, :, 0:2]
        center = xyz + net[:, :, 2:5]
        heading_scores = net[:, :, 5:5 + nh]
        heading_residuals_normalized = net[:, :, 5 + nh:5 + 2 * nh]
        size_scores = net[:, :, 5 + 2 * nh:5 + 2 * nh + ns]
        size_residuals_normalized = net[:, :, 5 + 2 * nh + ns:5 + 2 * nh + 4 * ns].reshape(
            batch_size, num_proposal, ns, 3)
        sem_cls_scores = net[:, :, 5 + 2 * nh + 4 * ns:5 + 2 * nh + 4 * ns + num_class]
        bbox_feature = net[:, :, 5 + 2 * nh + 4 * ns + num_class:]

        data_dict['objectness_scores'] = objectness_scores
        data_dict['center'] = center
        data_dict['heading_scores'] = heading_scores
        data_dict['heading_residuals_normalized'] = heading_residuals_normalized
        data_dict['heading_residuals'] = heading_residuals_normalized * (np.pi / nh)
        data_dict['size_scores'] = size_scores
        data_dict['size_residuals_normalized'] = size_residuals_normalized
        data_dict['size_residuals'] = size_residuals_normalized * mean_size_arr[None, None]
        data_dict['sem_cls_scores'] = sem_cls_scores
        # TODO(synk): 'bbox_corner' (decode_pred_box) depends on external numpy code
        # (ScannetDatasetConfig.param2obb_batch / get_3d_box_batch); omitted.
        data_dict['bbox_feature'] = bbox_feature
        data_dict['query_xyz'] = xyz
        data_dict['bbox_mask'] = jnp.argmax(objectness_scores, -1)
        data_dict['bbox_sems'] = jnp.argmax(sem_cls_scores, -1)
        data_dict['sem_cls'] = jnp.argmax(sem_cls_scores, -1)
        return data_dict


# --------------------------------- main ------------------------------------ #

if __name__ == "__main__":
    num_class, num_heading_bin, num_size_cluster = 4, 2, 4
    num_layers, batch, num_proposal, seed_feat_dim = 2, 2, 8, 256

    key = jax.random.PRNGKey(0)
    k_xyz, k_feat, k_param, k_msz = jax.random.split(key, 4)

    mean_size_arr = jax.random.uniform(k_msz, (num_size_cluster, 3), jnp.float32, 0.2, 2.0)
    xyz = jax.random.normal(k_xyz, (batch, num_proposal, 3), jnp.float32)
    # features: (num_layers, num_proposal, batch, 256) so permute(0,2,3,1) -> (L, B, C, K)
    features = jax.random.normal(
        k_feat, (num_layers, num_proposal, batch, seed_feat_dim), jnp.float32)

    module = ProposalModuleJax(num_class, num_heading_bin, num_size_cluster,
                               np.asarray(mean_size_arr), num_proposal,
                               sampling="vote_fps", seed_feat_dim=seed_feat_dim,
                               key=k_param)

    data_dict = module(xyz, features, {})
    jax.block_until_ready(data_dict['center'])
    jax.block_until_ready(data_dict['size_residuals'])
    jax.block_until_ready(data_dict['bbox_feature'])

    # Numerical self-check of the Pallas hot path against a plain-JAX reference
    # mirroring the same bf16-matmul / f32-accumulate math (validates the fused
    # layout handling: native-input index maps, NCW output, exact out_dim).
    got = proposal_mlp(features, module.params, module.out_dim, module._num_cores)
    ref = _ref_mlp(features, module.params)
    np.testing.assert_allclose(np.asarray(got), np.asarray(ref), rtol=1e-2, atol=1e-2)
    assert data_dict['bbox_feature'].shape == (batch, num_proposal, 128)

    print("KERNEL_OK")
</pallas_src>

<mosaic_0001>
module attributes {stable_mosaic.version = 11 : i64} {
  func.func @_proposal_mlp_kernel(%arg0: i32, %arg1: i32, %arg2: memref<1x8x2x256xf32, #tpu.memory_space<vmem>>, %arg3: memref<128x256xbf16, #tpu.memory_space<vmem>>, %arg4: memref<128x1xf32, #tpu.memory_space<vmem>>, %arg5: memref<128x128xbf16, #tpu.memory_space<vmem>>, %arg6: memref<128x1xf32, #tpu.memory_space<vmem>>, %arg7: memref<157x128xbf16, #tpu.memory_space<vmem>>, %arg8: memref<157x1xf32, #tpu.memory_space<vmem>>, %arg9: memref<1x2x157x8xf32, #tpu.memory_space<vmem>>) attributes {dimension_semantics = [#tpu.dimension_semantics<parallel>, #tpu.dimension_semantics<parallel>], iteration_bounds = array<i64: 2, 1>, scalar_prefetch = 0 : i64, scratch_operands = 0 : i64, tpu.core_type = #tpu.core_type<tc>, window_params = [{transform_indices = @transform_0, window_bounds = array<i64: 1, 8, 2, 256>}, {pipeline_mode = #tpu.pipeline_mode<synchronous>, transform_indices = @transform_1, window_bounds = array<i64: 128, 256>}, {pipeline_mode = #tpu.pipeline_mode<synchronous>, transform_indices = @transform_2, window_bounds = array<i64: 128, 1>}, {pipeline_mode = #tpu.pipeline_mode<synchronous>, transform_indices = @transform_3, window_bounds = array<i64: 128, 128>}, {pipeline_mode = #tpu.pipeline_mode<synchronous>, transform_indices = @transform_4, window_bounds = array<i64: 128, 1>}, {pipeline_mode = #tpu.pipeline_mode<synchronous>, transform_indices = @transform_5, window_bounds = array<i64: 157, 128>}, {pipeline_mode = #tpu.pipeline_mode<synchronous>, transform_indices = @transform_6, window_bounds = array<i64: 157, 1>}, {transform_indices = @transform_7, window_bounds = array<i64: 1, 2, 157, 8>}]} {
    %c0 = arith.constant 0 : index
    %c0_0 = arith.constant 0 : index
    %0 = vector.load %arg3[%c0, %c0_0] : memref<128x256xbf16, #tpu.memory_space<vmem>>, vector<128x256xbf16>
    %c0_1 = arith.constant 0 : index
    %c0_2 = arith.constant 0 : index
    %1 = vector.load %arg5[%c0_1, %c0_2] : memref<128x128xbf16, #tpu.memory_space<vmem>>, vector<128x128xbf16>
    %c0_3 = arith.constant 0 : index
    %c0_4 = arith.constant 0 : index
    %2 = vector.load %arg7[%c0_3, %c0_4] : memref<157x128xbf16, #tpu.memory_space<vmem>>, vector<157x128xbf16>
    %c0_5 = arith.constant 0 : index
    %c0_6 = arith.constant 0 : index
    %3 = vector.load %arg4[%c0_5, %c0_6] : memref<128x1xf32, #tpu.memory_space<vmem>>, vector<128x1xf32>
    %4 = vector.shape_cast %3 : vector<128x1xf32> to vector<128x1xf32>
    %5 = vector.broadcast %4 : vector<128x1xf32> to vector<128x8xf32>
    %c0_7 = arith.constant 0 : index
    %c0_8 = arith.constant 0 : index
    %6 = vector.load %arg6[%c0_7, %c0_8] : memref<128x1xf32, #tpu.memory_space<vmem>>, vector<128x1xf32>
    %7 = vector.shape_cast %6 : vector<128x1xf32> to vector<128x1xf32>
    %8 = vector.broadcast %7 : vector<128x1xf32> to vector<128x8xf32>
    %c0_9 = arith.constant 0 : index
    %c0_10 = arith.constant 0 : index
    %9 = vector.load %arg8[%c0_9, %c0_10] : memref<157x1xf32, #tpu.memory_space<vmem>>, vector<157x1xf32>
    %10 = vector.shape_cast %9 : vector<157x1xf32> to vector<157x1xf32>
    %11 = vector.broadcast %10 : vector<157x1xf32> to vector<157x8xf32>
    %c0_i32 = arith.constant 0 : i32
    %c0_11 = arith.constant 0 : index
    %c0_12 = arith.constant 0 : index
    %12 = arith.index_cast %c0_i32 : i32 to index
    %c0_13 = arith.constant 0 : index
    %13 = vector.load %arg2[%c0_11, %c0_12, %12, %c0_13] : memref<1x8x2x256xf32, #tpu.memory_space<vmem>>, vector<1x8x1x256xf32>
    %14 = vector.shape_cast %13 : vector<1x8x1x256xf32> to vector<8x256xf32>
    %15 = arith.truncf %14 : vector<8x256xf32> to vector<8x256xbf16>
    %cst = arith.constant dense<0.000000e+00> : vector<128x8xf32>
    %16 = tpu.matmul %0, %15, %cst {dimension_numbers = #tpu.dot_dimension_numbers<[1], [1], [0], [0], [0, 0, 1, 0], [], []>} : vector<128x256xbf16>, vector<8x256xbf16>, vector<128x8xf32> -> vector<128x8xf32>
    %17 = arith.addf %16, %5 : vector<128x8xf32>
    %cst_14 = arith.constant 0.000000e+00 : f32
    %18 = vector.broadcast %cst_14 : f32 to vector<128x8xf32>
    %19 = arith.maximumf %17, %18 : vector<128x8xf32>
    %20 = arith.truncf %19 : vector<128x8xf32> to vector<128x8xbf16>
    %cst_15 = arith.constant dense<0.000000e+00> : vector<128x8xf32>
    %21 = tpu.matmul %1, %20, %cst_15 {dimension_numbers = #tpu.dot_dimension_numbers<[1], [0], [0], [1], [0, 0, 1, 1], [], []>} : vector<128x128xbf16>, vector<128x8xbf16>, vector<128x8xf32> -> vector<128x8xf32>
    %22 = arith.addf %21, %8 : vector<128x8xf32>
    %cst_16 = arith.constant 0.000000e+00 : f32
    %23 = vector.broadcast %cst_16 : f32 to vector<128x8xf32>
    %24 = arith.maximumf %22, %23 : vector<128x8xf32>
    %25 = arith.truncf %24 : vector<128x8xf32> to vector<128x8xbf16>
    %cst_17 = arith.constant dense<0.000000e+00> : vector<157x8xf32>
    %26 = tpu.matmul %2, %25, %cst_17 {dimension_numbers = #tpu.dot_dimension_numbers<[1], [0], [0], [1], [0, 0, 1, 1], [], []>} : vector<157x128xbf16>, vector<128x8xbf16>, vector<157x8xf32> -> vector<157x8xf32>
    %27 = arith.addf %26, %11 : vector<157x8xf32>
    %c0_18 = arith.constant 0 : index
    %28 = arith.index_cast %c0_i32 : i32 to index
    %c0_19 = arith.constant 0 : index
    %c0_20 = arith.constant 0 : index
    %29 = vector.load %arg9[%c0_18, %28, %c0_19, %c0_20] : memref<1x2x157x8xf32, #tpu.memory_space<vmem>>, vector<1x1x157x8xf32>
    %30 = vector.shape_cast %29 : vector<1x1x157x8xf32> to vector<157x8xf32>
    %31 = vector.shape_cast %27 : vector<157x8xf32> to vector<1x1x157x8xf32>
    tpu.vector_store %arg9[%c0_18, %28, %c0_19, %c0_20], %31 {strides = array<i32>} : memref<1x2x157x8xf32, #tpu.memory_space<vmem>>, vector<1x1x157x8xf32>,
    %c1_i32 = arith.constant 1 : i32
    %c0_21 = arith.constant 0 : index
    %c0_22 = arith.constant 0 : index
    %32 = arith.index_cast %c1_i32 : i32 to index
    %c0_23 = arith.constant 0 : index
    %33 = vector.load %arg2[%c0_21, %c0_22, %32, %c0_23] : memref<1x8x2x256xf32, #tpu.memory_space<vmem>>, vector<1x8x1x256xf32>
    %34 = vector.shape_cast %33 : vector<1x8x1x256xf32> to vector<8x256xf32>
    %35 = arith.truncf %34 : vector<8x256xf32> to vector<8x256xbf16>
    %cst_24 = arith.constant dense<0.000000e+00> : vector<128x8xf32>
    %36 = tpu.matmul %0, %35, %cst_24 {dimension_numbers = #tpu.dot_dimension_numbers<[1], [1], [0], [0], [0, 0, 1, 0], [], []>} : vector<128x256xbf16>, vector<8x256xbf16>, vector<128x8xf32> -> vector<128x8xf32>
    %37 = arith.addf %36, %5 : vector<128x8xf32>
    %cst_25 = arith.constant 0.000000e+00 : f32
    %38 = vector.broadcast %cst_25 : f32 to vector<128x8xf32>
    %39 = arith.maximumf %37, %38 : vector<128x8xf32>
    %40 = arith.truncf %39 : vector<128x8xf32> to vector<128x8xbf16>
    %cst_26 = arith.constant dense<0.000000e+00> : vector<128x8xf32>
    %41 = tpu.matmul %1, %40, %cst_26 {dimension_numbers = #tpu.dot_dimension_numbers<[1], [0], [0], [1], [0, 0, 1, 1], [], []>} : vector<128x128xbf16>, vector<128x8xbf16>, vector<128x8xf32> -> vector<128x8xf32>
    %42 = arith.addf %41, %8 : vector<128x8xf32>
    %cst_27 = arith.constant 0.000000e+00 : f32
    %43 = vector.broadcast %cst_27 : f32 to vector<128x8xf32>
    %44 = arith.maximumf %42, %43 : vector<128x8xf32>
    %45 = arith.truncf %44 : vector<128x8xf32> to vector<128x8xbf16>
    %cst_28 = arith.constant dense<0.000000e+00> : vector<157x8xf32>
    %46 = tpu.matmul %2, %45, %cst_28 {dimension_numbers = #tpu.dot_dimension_numbers<[1], [0], [0], [1], [0, 0, 1, 1], [], []>} : vector<157x128xbf16>, vector<128x8xbf16>, vector<157x8xf32> -> vector<157x8xf32>
    %47 = arith.addf %46, %11 : vector<157x8xf32>
    %c0_29 = arith.constant 0 : index
    %48 = arith.index_cast %c1_i32 : i32 to index
    %c0_30 = arith.constant 0 : index
    %c0_31 = arith.constant 0 : index
    %49 = vector.load %arg9[%c0_29, %48, %c0_30, %c0_31] : memref<1x2x157x8xf32, #tpu.memory_space<vmem>>, vector<1x1x157x8xf32>
    %50 = vector.shape_cast %49 : vector<1x1x157x8xf32> to vector<157x8xf32>
    %51 = vector.shape_cast %47 : vector<157x8xf32> to vector<1x1x157x8xf32>
    tpu.vector_store %arg9[%c0_29, %48, %c0_30, %c0_31], %51 {strides = array<i32>} : memref<1x2x157x8xf32, #tpu.memory_space<vmem>>, vector<1x1x157x8xf32>,
    %c2_i32 = arith.constant 2 : i32
    return
  }
  func.func @transform_0(%arg0: i32, %arg1: i32) -> (i32, i32, i32, i32) {
    %c0_i32 = arith.constant 0 : i32
    %c0_i32_0 = arith.constant 0 : i32
    %c0_i32_1 = arith.constant 0 : i32
    return %arg0, %arg1, %c0_i32, %c0_i32_0 : i32, i32, i32, i32
  }
  func.func @transform_1(%arg0: i32, %arg1: i32) -> (i32, i32) {
    %c0_i32 = arith.constant 0 : i32
    %c0_i32_0 = arith.constant 0 : i32
    %c0_i32_1 = arith.constant 0 : i32
    return %c0_i32, %c0_i32_0 : i32, i32
  }
  func.func @transform_2(%arg0: i32, %arg1: i32) -> (i32, i32) {
    %c0_i32 = arith.constant 0 : i32
    %c0_i32_0 = arith.constant 0 : i32
    %c0_i32_1 = arith.constant 0 : i32
    return %c0_i32, %c0_i32_0 : i32, i32
  }
  func.func @transform_3(%arg0: i32, %arg1: i32) -> (i32, i32) {
    %c0_i32 = arith.constant 0 : i32
    %c0_i32_0 = arith.constant 0 : i32
    %c0_i32_1 = arith.constant 0 : i32
    return %c0_i32, %c0_i32_0 : i32, i32
  }
  func.func @transform_4(%arg0: i32, %arg1: i32) -> (i32, i32) {
    %c0_i32 = arith.constant 0 : i32
    %c0_i32_0 = arith.constant 0 : i32
    %c0_i32_1 = arith.constant 0 : i32
    return %c0_i32, %c0_i32_0 : i32, i32
  }
  func.func @transform_5(%arg0: i32, %arg1: i32) -> (i32, i32) {
    %c0_i32 = arith.constant 0 : i32
    %c0_i32_0 = arith.constant 0 : i32
    %c0_i32_1 = arith.constant 0 : i32
    return %c0_i32, %c0_i32_0 : i32, i32
  }
  func.func @transform_6(%arg0: i32, %arg1: i32) -> (i32, i32) {
    %c0_i32 = arith.constant 0 : i32
    %c0_i32_0 = arith.constant 0 : i32
    %c0_i32_1 = arith.constant 0 : i32
    return %c0_i32, %c0_i32_0 : i32, i32
  }
  func.func @transform_7(%arg0: i32, %arg1: i32) -> (i32, i32, i32, i32) {
    %c0_i32 = arith.constant 0 : i32
    %c0_i32_0 = arith.constant 0 : i32
    %c0_i32_1 = arith.constant 0 : i32
    return %arg0, %c0_i32, %c0_i32_0, %arg1 : i32, i32, i32, i32
  }
}

</mosaic_0001>

<llo_original>
// kernel: tpu_custom_call.1
$region0: #{tpu_custom_call.1}
  #allocation0 [shape = 'u32[]', space=smem, size = 0x4, offset = 0x4, fixed_abs, tag = 'smem constant byte address 0x4 - core index']
  #allocation1 [shape = 'u32[72,128]{1,0:T(1,128)}', space=vmem, size = 0x9000, scoped, tag = 'internal scratch']
  %s0 = inlined_call_operand.vmem [shape: f32[2,8,2,256], index: 0, kind: input, shape index: {}]
  %s1 = inlined_call_operand.vmem [shape: bf16[128,256], index: 1, kind: input, shape index: {}]
  %s2 = inlined_call_operand.vmem [shape: f32[128,1], index: 2, kind: input, shape index: {}]
  %s3 = inlined_call_operand.vmem [shape: bf16[128,128], index: 3, kind: input, shape index: {}]
  %s4 = inlined_call_operand.vmem [shape: f32[128,1], index: 4, kind: input, shape index: {}]
  %s5 = inlined_call_operand.vmem [shape: bf16[157,128], index: 5, kind: input, shape index: {}]
  %s6 = inlined_call_operand.vmem [shape: f32[157,1], index: 6, kind: input, shape index: {}]
  %s7 = inlined_call_operand.vmem [shape: f32[2,2,157,8], index: 7, kind: output, shape index: {}]
  %s8 = sld [smem:[#allocation0]]
  $region61: #{tpu_custom_call.1} parent=0
    _
  %s10 = ssub.s32 1, %s8
  %s11 = scalar_select 0, %s10, %s8
  loop: start=0, step=1, limit=4
  $region2: #{tpu_custom_call.1} parent=0 // loop_pre_header
    _
  $region3: #{tpu_custom_call.1} parent=0 // loop_header
    %s13 = sphi 0, %s17
    %p14 = scmp.ge.s32.totalorder %s13, 4
    %s20 = sphi 0, %s32
    %s21 = sphi 0, %s28
    %s22 = sphi 0, %s20
    %s23 = sphi 0, %s21
    %s24 = sphi 0, %s22
    %s25 = sphi 0, %s23
    %s37 = sphi 0, %s39
    %s40 = sphi 0, %s37
    %s41 = sphi 0, %s40
    %s57 = sphi 0, %s41
    %s61 = sphi 0, %s61
    %s63 = sphi 0, %s61
    %s64 = sphi 0, %s63
    %s78 = sphi 0, %s64
    %s82 = sphi 0, %s82
    %s84 = sphi 0, %s82
    %s85 = sphi 0, %s84
    %s99 = sphi 0, %s85
    %s103 = sphi 0, %s103
    %s105 = sphi 0, %s103
    %s106 = sphi 0, %s105
    %s120 = sphi 0, %s106
    %s124 = sphi 0, %s124
    %s126 = sphi 0, %s124
    %s127 = sphi 0, %s126
    %s141 = sphi 0, %s127
    %s145 = sphi 0, %s145
    %s147 = sphi 0, %s145
    %s148 = sphi 0, %s147
    %s162 = sphi 0, %s148
    %s166 = sphi 0, %s166
    %s168 = sphi 0, %s166
    %s169 = sphi 0, %s168
    %s183 = sphi 0, %s169
    %s191 = sphi 0, %s193
    %s194 = sphi 0, %s191
    %s195 = sphi 0, %s194
    %s211 = sphi 0, %s195
  $region4: #{tpu_custom_call.1} parent=0 // loop_header_branch
    %16 = sbr.rel (%p14) target = $region8
  $region5: #{tpu_custom_call.1} parent=0 // loop_body
    %s18 = ssub.s32 %s13, 1
    %s19 = ssub.s32 %s13, 2
    %s26 = sadd.s32 1, %s21
    %p27 = scmp.ge.s32.totalorder %s26, 1
    %s28 = scalar_select %p27, 0, %s26
    %s29 = sadd.s32 1, %s20
    %s30 = scalar_select %p27, %s29, %s20
    %p31 = scmp.ge.s32.totalorder %s30, 2
    %s32 = scalar_select %p31, 0, %s30
    %s33 = ssub.s32 %s20, %s32
    %s34 = ssub.s32 %s21, %s28
    %s35 = sor.u32 %s33, %s34
    %p36 = scmp.eq.s32.totalorder %s35, 0
    %s38 = sadd.s32 %s37, 1
    %s39 = scalar_select %p36, %s37, %s38
    %p42 = pneg %p36
    %p43 = scmp.eq.s32.totalorder %s13, 1
    %p44 = por %p42, %p43
    %p45 = scmp.ne.s32.totalorder %s37, %s40
    %p46 = scmp.eq.s32.totalorder %s13, 0
    %p47 = por %p45, %p46
    %p48 = scmp.ne.s32.totalorder %s37, %s40
    %p49 = scmp.eq.s32.totalorder %s18, 1
    %p50 = por %p48, %p49
    %p51 = scmp.ne.s32.totalorder %s40, %s41
    %p52 = scmp.eq.s32.totalorder %s18, 0
    %p53 = por %p51, %p52
    %p54 = scmp.ne.s32.totalorder %s40, %s41
    %p55 = scmp.eq.s32.totalorder %s19, 1
    %p56 = por %p54, %p55
    %p58 = scmp.ne.s32.totalorder %s41, %s57
    %p59 = scmp.eq.s32.totalorder %s19, 0
    %p60 = por %p58, %p59
    %s62 = sadd.s32 %s61, 1
    %p65 = scmp.eq.s32.totalorder %s13, 1
    %p66 = scmp.ne.s32.totalorder %s61, %s63
    %p67 = scmp.eq.s32.totalorder %s13, 0
    %p68 = por %p66, %p67
    %p69 = scmp.ne.s32.totalorder %s61, %s63
    %p70 = scmp.eq.s32.totalorder %s18, 1
    %p71 = por %p69, %p70
    %p72 = scmp.ne.s32.totalorder %s63, %s64
    %p73 = scmp.eq.s32.totalorder %s18, 0
    %p74 = por %p72, %p73
    %p75 = scmp.ne.s32.totalorder %s63, %s64
    %p76 = scmp.eq.s32.totalorder %s19, 1
    %p77 = por %p75, %p76
    %p79 = scmp.ne.s32.totalorder %s64, %s78
    %p80 = scmp.eq.s32.totalorder %s19, 0
    %p81 = por %p79, %p80
    %s83 = sadd.s32 %s82, 1
    %p86 = scmp.eq.s32.totalorder %s13, 1
    %p87 = scmp.ne.s32.totalorder %s82, %s84
    %p88 = scmp.eq.s32.totalorder %s13, 0
    %p89 = por %p87, %p88
    %p90 = scmp.ne.s32.totalorder %s82, %s84
    %p91 = scmp.eq.s32.totalorder %s18, 1
    %p92 = por %p90, %p91
    %p93 = scmp.ne.s32.totalorder %s84, %s85
    %p94 = scmp.eq.s32.totalorder %s18, 0
    %p95 = por %p93, %p94
    %p96 = scmp.ne.s32.totalorder %s84, %s85
    %p97 = scmp.eq.s32.totalorder %s19, 1
    %p98 = por %p96, %p97
    %p100 = scmp.ne.s32.totalorder %s85, %s99
    %p101 = scmp.eq.s32.totalorder %s19, 0
    %p102 = por %p100, %p101
    %s104 = sadd.s32 %s103, 1
    %p107 = scmp.eq.s32.totalorder %s13, 1
    %p108 = scmp.ne.s32.totalorder %s103, %s105
    %p109 = scmp.eq.s32.totalorder %s13, 0
    %p110 = por %p108, %p109
    %p111 = scmp.ne.s32.totalorder %s103, %s105
    %p112 = scmp.eq.s32.totalorder %s18, 1
    %p113 = por %p111, %p112
    %p114 = scmp.ne.s32.totalorder %s105, %s106
    %p115 = scmp.eq.s32.totalorder %s18, 0
    %p116 = por %p114, %p115
    %p117 = scmp.ne.s32.totalorder %s105, %s106
    %p118 = scmp.eq.s32.totalorder %s19, 1
    %p119 = por %p117, %p118
    %p121 = scmp.ne.s32.totalorder %s106, %s120
    %p122 = scmp.eq.s32.totalorder %s19, 0
    %p123 = por %p121, %p122
    %s125 = sadd.s32 %s124, 1
    %p128 = scmp.eq.s32.totalorder %s13, 1
    %p129 = scmp.ne.s32.totalorder %s124, %s126
    %p130 = scmp.eq.s32.totalorder %s13, 0
    %p131 = por %p129, %p130
    %p132 = scmp.ne.s32.totalorder %s124, %s126
    %p133 = scmp.eq.s32.totalorder %s18, 1
    %p134 = por %p132, %p133
    %p135 = scmp.ne.s32.totalorder %s126, %s127
    %p136 = scmp.eq.s32.totalorder %s18, 0
    %p137 = por %p135, %p136
    %p138 = scmp.ne.s32.totalorder %s126, %s127
    %p139 = scmp.eq.s32.totalorder %s19, 1
    %p140 = por %p138, %p139
    %p142 = scmp.ne.s32.totalorder %s127, %s141
    %p143 = scmp.eq.s32.totalorder %s19, 0
    %p144 = por %p142, %p143
    %s146 = sadd.s32 %s145, 1
    %p149 = scmp.eq.s32.totalorder %s13, 1
    %p150 = scmp.ne.s32.totalorder %s145, %s147
    %p151 = scmp.eq.s32.totalorder %s13, 0
    %p152 = por %p150, %p151
    %p153 = scmp.ne.s32.totalorder %s145, %s147
    %p154 = scmp.eq.s32.totalorder %s18, 1
    %p155 = por %p153, %p154
    %p156 = scmp.ne.s32.totalorder %s147, %s148
    %p157 = scmp.eq.s32.totalorder %s18, 0
    %p158 = por %p156, %p157
    %p159 = scmp.ne.s32.totalorder %s147, %s148
    %p160 = scmp.eq.s32.totalorder %s19, 1
    %p161 = por %p159, %p160
    %p163 = scmp.ne.s32.totalorder %s148, %s162
    %p164 = scmp.eq.s32.totalorder %s19, 0
    %p165 = por %p163, %p164
    %s167 = sadd.s32 %s166, 1
    %p170 = scmp.eq.s32.totalorder %s13, 1
    %p171 = scmp.ne.s32.totalorder %s166, %s168
    %p172 = scmp.eq.s32.totalorder %s13, 0
    %p173 = por %p171, %p172
    %p174 = scmp.ne.s32.totalorder %s166, %s168
    %p175 = scmp.eq.s32.totalorder %s18, 1
    %p176 = por %p174, %p175
    %p177 = scmp.ne.s32.totalorder %s168, %s169
    %p178 = scmp.eq.s32.totalorder %s18, 0
    %p179 = por %p177, %p178
    %p180 = scmp.ne.s32.totalorder %s168, %s169
    %p181 = scmp.eq.s32.totalorder %s19, 1
    %p182 = por %p180, %p181
    %p184 = scmp.ne.s32.totalorder %s169, %s183
    %p185 = scmp.eq.s32.totalorder %s19, 0
    %p186 = por %p184, %p185
    %s187 = ssub.s32 %s20, %s32
    %s188 = ssub.s32 %s21, %s28
    %s189 = sor.u32 %s187, %s188
    %p190 = scmp.eq.s32.totalorder %s189, 0
    %s192 = sadd.s32 %s191, 1
    %s193 = scalar_select %p190, %s191, %s192
    %p196 = pneg %p190
    %p197 = scmp.eq.s32.totalorder %s13, 1
    %p198 = por %p196, %p197
    %p199 = scmp.ne.s32.totalorder %s191, %s194
    %p200 = scmp.eq.s32.totalorder %s13, 0
    %p201 = por %p199, %p200
    %p202 = scmp.ne.s32.totalorder %s191, %s194
    %p203 = scmp.eq.s32.totalorder %s18, 1
    %p204 = por %p202, %p203
    %p205 = scmp.ne.s32.totalorder %s194, %s195
    %p206 = scmp.eq.s32.totalorder %s18, 0
    %p207 = por %p205, %p206
    %p208 = scmp.ne.s32.totalorder %s194, %s195
    %p209 = scmp.eq.s32.totalorder %s19, 1
    %p210 = por %p208, %p209
    %p212 = scmp.ne.s32.totalorder %s195, %s211
    %p213 = scmp.eq.s32.totalorder %s19, 0
    %p214 = por %p212, %p213
    %p215 = scmp.le.s32.totalorder 1, %s13
    %p216 = scmp.lt.s32.totalorder %s13, 3
    %p217 = pnand %p215, %p216
    %p218 = pneg %p217
    // Predicated region
    $region9: #{tpu_custom_call.1} parent=5 // pred_check
      _
    $region10: #{tpu_custom_call.1} parent=5 // pred_check_branch
      %220 = sbr.rel (%p217) target = $region12
    $region11: #{tpu_custom_call.1} parent=5 // pred_region
      %s221 = ssub.s32 %s13, 1
      // Predicated region
      $region13: #{tpu_custom_call.1} parent=11 // pred_check
        %p222 = pneg %p74
      $region14: #{tpu_custom_call.1} parent=11 // pred_check_branch
        %224 = sbr.rel (%p222) target = $region16
      $region15: #{tpu_custom_call.1} parent=11 // pred_region
        _
      $region16: #{tpu_custom_call.1} parent=11 // pred_fallthru
        _
      // Predicated region
      $region17: #{tpu_custom_call.1} parent=11 // pred_check
        %p225 = pneg %p95
      $region18: #{tpu_custom_call.1} parent=11 // pred_check_branch
        %227 = sbr.rel (%p225) target = $region20
      $region19: #{tpu_custom_call.1} parent=11 // pred_region
        _
      $region20: #{tpu_custom_call.1} parent=11 // pred_fallthru
        _
      // Predicated region
      $region21: #{tpu_custom_call.1} parent=11 // pred_check
        %p228 = pneg %p116
      $region22: #{tpu_custom_call.1} parent=11 // pred_check_branch
        %230 = sbr.rel (%p228) target = $region24
      $region23: #{tpu_custom_call.1} parent=11 // pred_region
        _
      $region24: #{tpu_custom_call.1} parent=11 // pred_fallthru
        _
      // Predicated region
      $region25: #{tpu_custom_call.1} parent=11 // pred_check
        %p231 = pneg %p137
      $region26: #{tpu_custom_call.1} parent=11 // pred_check_branch
        %233 = sbr.rel (%p231) target = $region28
      $region27: #{tpu_custom_call.1} parent=11 // pred_region
        _
      $region28: #{tpu_custom_call.1} parent=11 // pred_fallthru
        _
      // Predicated region
      $region29: #{tpu_custom_call.1} parent=11 // pred_check
        %p234 = pneg %p158
      $region30: #{tpu_custom_call.1} parent=11 // pred_check_branch
        %236 = sbr.rel (%p234) target = $region32
      $region31: #{tpu_custom_call.1} parent=11 // pred_region
        _
      $region32: #{tpu_custom_call.1} parent=11 // pred_fallthru
        _
      // Predicated region
      $region33: #{tpu_custom_call.1} parent=11 // pred_check
        %p237 = pneg %p179
      $region34: #{tpu_custom_call.1} parent=11 // pred_check_branch
        %239 = sbr.rel (%p237) target = $region36
      $region35: #{tpu_custom_call.1} parent=11 // pred_region
        _
      $region36: #{tpu_custom_call.1} parent=11 // pred_fallthru
        _
    $region12: #{tpu_custom_call.1} parent=5 // pred_fallthru
      _
    %p240 = scmp.lt.s32.totalorder %s13, 2
    // Predicated region
    $region37: #{tpu_custom_call.1} parent=5 // pred_check
      %p241 = pneg %p240
    $region38: #{tpu_custom_call.1} parent=5 // pred_check_branch
      %243 = sbr.rel (%p241) target = $region40
    $region39: #{tpu_custom_call.1} parent=5 // pred_region
      // Predicated region
      $region41: #{tpu_custom_call.1} parent=39 // pred_check
        %p244 = pneg %p47
      $region42: #{tpu_custom_call.1} parent=39 // pred_check_branch
        %246 = sbr.rel (%p244) target = $region44
      $region43: #{tpu_custom_call.1} parent=39 // pred_region
        %s247 = smul.u32 8, %s21
        %p248 = scmp.lt.s32.totalorder %s20, 1
        %s249 = scalar_select %p248, %s20, 1
        %p250 = scmp.lt.s32.totalorder %s247, 7
        %s251 = scalar_select %p250, %s247, 7
        %s252 = smul.addr %s251, 2
        %s253 = smul.addr %s249, 16
        %s254 = sadd.s32 %s252, %s253
        %s255 = smul.addr %s254, 2
        %s256 = scalar_lea.vmem %s0, %s255
        %s257 = smul.u32 8, %s21
      $region44: #{tpu_custom_call.1} parent=39 // pred_fallthru
        _
    $region40: #{tpu_custom_call.1} parent=5 // pred_fallthru
      _
    %p258 = scmp.le.s32.totalorder 1, %s13
    %p259 = scmp.lt.s32.totalorder %s13, 3
    %p260 = pnand %p258, %p259
    %p261 = pneg %p260
    // Predicated region
    $region45: #{tpu_custom_call.1} parent=5 // pred_check
      _
    $region46: #{tpu_custom_call.1} parent=5 // pred_check_branch
      %263 = sbr.rel (%p260) target = $region48
    $region47: #{tpu_custom_call.1} parent=5 // pred_region
      %s264 = ssub.s32 %s13, 1
      %s265 = smul.u32 8, %s23
      %p266 = scmp.lt.s32.totalorder %s22, 1
      %s267 = scalar_select %p266, %s22, 1
      %p268 = scmp.lt.s32.totalorder %s265, 7
      %s269 = scalar_select %p268, %s265, 7
      %s270 = smul.addr %s269, 2
      %s271 = smul.addr %s267, 16
      %s272 = sadd.s32 %s270, %s271
      %s273 = smul.addr %s272, 2
      %s274 = scalar_lea.vmem %s0, %s273
      %p275 = pneg %p53
      %p276 = pneg %p50
      %p277 = pneg %p74
      %p278 = pneg %p71
      %p279 = pneg %p95
      %p280 = pneg %p92
      %p281 = pneg %p116
      %p282 = pneg %p113
      %p283 = pneg %p137
      %p284 = pneg %p134
      %p285 = pneg %p158
      %p286 = pneg %p155
      %p287 = pneg %p179
      %p288 = pneg %p176
      %p289 = pneg %p207
      %p290 = pneg %p204
      %p291 = scmp.lt.s32.totalorder %s22, 1
      %s292 = scalar_select %p291, %s22, 1
      %p293 = scmp.lt.s32.totalorder %s23, 0
      %s294 = scalar_select %p293, %s23, 0
      %s295 = smul.addr %s292, 40
      %s296 = sadd.s32 %s294, %s295
      %s297 = smul.addr %s296, 8
      %s298 = scalar_lea.vmem %s7, %s297
      %s299 = smul.u32 8, %s23
      %p300 = scmp.lt.s32.totalorder %s22, 1
      %s301 = scalar_select %p300, %s22, 1
      %p302 = scmp.lt.s32.totalorder %s299, 7
      %s303 = scalar_select %p302, %s299, 7
      %s304 = smul.addr %s303, 2
      %s305 = smul.addr %s301, 16
      %s306 = sadd.s32 %s304, %s305
      %s307 = smul.addr %s306, 2
      %s308 = scalar_lea.vmem %s0, %s307
      %s309 = smul.u32 8, %s23
      %p310 = scmp.lt.s32.totalorder %s22, 1
      %s311 = scalar_select %p310, %s22, 1
      %p312 = scmp.lt.s32.totalorder %s23, 0
      %s313 = scalar_select %p312, %s23, 0
      %s314 = smul.addr %s311, 40
      %s315 = sadd.s32 %s313, %s314
      %s316 = smul.addr %s315, 8
      %s317 = scalar_lea.vmem %s7, %s316
      %v319 = vld [vmem:[%s1] sm:$0xff]
      %v320 = vld [vmem:[%s1 + $0x8] sm:$0xff]
      %v321 = vld [vmem:[%s1 + $0x10] sm:$0xff]
      %v322 = vld [vmem:[%s1 + $0x18] sm:$0xff]
      %v323 = vld [vmem:[%s1 + $0x20] sm:$0xff]
      %v324 = vld [vmem:[%s1 + $0x28] sm:$0xff]
      %v325 = vld [vmem:[%s1 + $0x30] sm:$0xff]
      %v326 = vld [vmem:[%s1 + $0x38] sm:$0xff]
      %v327 = vld [vmem:[%s1 + $0x40] sm:$0xff]
      %v328 = vld [vmem:[%s1 + $0x48] sm:$0xff]
      %v329 = vld [vmem:[%s1 + $0x50] sm:$0xff]
      %v330 = vld [vmem:[%s1 + $0x58] sm:$0xff]
      %v331 = vld [vmem:[%s1 + $0x60] sm:$0xff]
      %v332 = vld [vmem:[%s1 + $0x68] sm:$0xff]
      %v333 = vld [vmem:[%s1 + $0x70] sm:$0xff]
      %v334 = vld [vmem:[%s1 + $0x78] sm:$0xff]
      %v335 = vld [vmem:[%s3] sm:$0xf]
      %v336 = vld [vmem:[%s3 + $0x4] sm:$0xf]
      %v337 = vld [vmem:[%s3 + $0x8] sm:$0xf]
      %v338 = vld [vmem:[%s3 + $0xc] sm:$0xf]
      %v339 = vld [vmem:[%s3 + $0x10] sm:$0xf]
      %v340 = vld [vmem:[%s3 + $0x14] sm:$0xf]
      %v341 = vld [vmem:[%s3 + $0x18] sm:$0xf]
      %v342 = vld [vmem:[%s3 + $0x1c] sm:$0xf]
      %v343 = vld [vmem:[%s3 + $0x20] sm:$0xf]
      %v344 = vld [vmem:[%s3 + $0x24] sm:$0xf]
      %v345 = vld [vmem:[%s3 + $0x28] sm:$0xf]
      %v346 = vld [vmem:[%s3 + $0x2c] sm:$0xf]
      %v347 = vld [vmem:[%s3 + $0x30] sm:$0xf]
      %v348 = vld [vmem:[%s3 + $0x34] sm:$0xf]
      %v349 = vld [vmem:[%s3 + $0x38] sm:$0xf]
      %v350 = vld [vmem:[%s3 + $0x3c] sm:$0xf]
      %v351 = vld [vmem:[%s5] sm:$0xf]
      %v352 = vld [vmem:[%s5 + $0x4] sm:$0xf]
      %v353 = vld [vmem:[%s5 + $0x8] sm:$0xf]
      %v354 = vld [vmem:[%s5 + $0xc] sm:$0xf]
      %v355 = vld [vmem:[%s5 + $0x10] sm:$0xf]
      %v356 = vld [vmem:[%s5 + $0x14] sm:$0xf]
      %v357 = vld [vmem:[%s5 + $0x18] sm:$0xf]
      %v358 = vld [vmem:[%s5 + $0x1c] sm:$0xf]
      %v359 = vld [vmem:[%s5 + $0x20] sm:$0xf]
      %v360 = vld [vmem:[%s5 + $0x24] sm:$0xf]
      %v361 = vld [vmem:[%s5 + $0x28] sm:$0xf]
      %v362 = vld [vmem:[%s5 + $0x2c] sm:$0xf]
      %v363 = vld [vmem:[%s5 + $0x30] sm:$0xf]
      %v364 = vld [vmem:[%s5 + $0x34] sm:$0xf]
      %v365 = vld [vmem:[%s5 + $0x38] sm:$0xf]
      %v366 = vld [vmem:[%s5 + $0x3c] sm:$0xf]
      %v367 = vld [vmem:[%s5 + $0x40] sm:$0xf]
      %v368 = vld [vmem:[%s5 + $0x44] sm:$0xf]
      %v369 = vld [vmem:[%s5 + $0x48] sm:$0xf]
      %v370 = vld [vmem:[%s5 + $0x4c] sm:$0x7]
      %v371 = vld [vmem:[%s2] sm:$0xff]
      %v372 = vld [vmem:[%s2 + $0x8] sm:$0xff]
      %v373 = vld [vmem:[%s2 + $0x10] sm:$0xff]
      %v374 = vld [vmem:[%s2 + $0x18] sm:$0xff]
      %v375 = vld [vmem:[%s2 + $0x20] sm:$0xff]
      %v376 = vld [vmem:[%s2 + $0x28] sm:$0xff]
      %v377 = vld [vmem:[%s2 + $0x30] sm:$0xff]
      %v378 = vld [vmem:[%s2 + $0x38] sm:$0xff]
      %v379 = vld [vmem:[%s2 + $0x40] sm:$0xff]
      %v380 = vld [vmem:[%s2 + $0x48] sm:$0xff]
      %v381 = vld [vmem:[%s2 + $0x50] sm:$0xff]
      %v382 = vld [vmem:[%s2 + $0x58] sm:$0xff]
      %v383 = vld [vmem:[%s2 + $0x60] sm:$0xff]
      %v384 = vld [vmem:[%s2 + $0x68] sm:$0xff]
      %v385 = vld [vmem:[%s2 + $0x70] sm:$0xff]
      %v386 = vld [vmem:[%s2 + $0x78] sm:$0xff]
      %388 = vset.pattern.permute.xlu0 0
      %389 = vperm.xlu0 %388, %v371
      %v390 = vpop.permute.xlu0 %389
      %393 = vset.pattern.permute.xlu0 0
      %394 = vperm.xlu0 %393, %v372
      %v395 = vpop.permute.xlu0 %394
      %398 = vset.pattern.permute.xlu0 0
      %399 = vperm.xlu0 %398, %v373
      %v400 = vpop.permute.xlu0 %399
      %403 = vset.pattern.permute.xlu0 0
      %404 = vperm.xlu0 %403, %v374
      %v405 = vpop.permute.xlu0 %404
      %408 = vset.pattern.permute.xlu0 0
      %409 = vperm.xlu0 %408, %v375
      %v410 = vpop.permute.xlu0 %409
      %413 = vset.pattern.permute.xlu0 0
      %414 = vperm.xlu0 %413, %v376
      %v415 = vpop.permute.xlu0 %414
      %418 = vset.pattern.permute.xlu0 0
      %419 = vperm.xlu0 %418, %v377
      %v420 = vpop.permute.xlu0 %419
      %423 = vset.pattern.permute.xlu0 0
      %424 = vperm.xlu0 %423, %v378
      %v425 = vpop.permute.xlu0 %424
      %428 = vset.pattern.permute.xlu0 0
      %429 = vperm.xlu0 %428, %v379
      %v430 = vpop.permute.xlu0 %429
      %433 = vset.pattern.permute.xlu0 0
      %434 = vperm.xlu0 %433, %v380
      %v435 = vpop.permute.xlu0 %434
      %438 = vset.pattern.permute.xlu0 0
      %439 = vperm.xlu0 %438, %v381
      %v440 = vpop.permute.xlu0 %439
      %443 = vset.pattern.permute.xlu0 0
      %444 = vperm.xlu0 %443, %v382
      %v445 = vpop.permute.xlu0 %444
      %448 = vset.pattern.permute.xlu0 0
      %449 = vperm.xlu0 %448, %v383
      %v450 = vpop.permute.xlu0 %449
      %453 = vset.pattern.permute.xlu0 0
      %454 = vperm.xlu0 %453, %v384
      %v455 = vpop.permute.xlu0 %454
      %458 = vset.pattern.permute.xlu0 0
      %459 = vperm.xlu0 %458, %v385
      %v460 = vpop.permute.xlu0 %459
      %463 = vset.pattern.permute.xlu0 0
      %464 = vperm.xlu0 %463, %v386
      %v465 = vpop.permute.xlu0 %464
      %v467 = vld [vmem:[%s4] sm:$0xff]
      %v468 = vld [vmem:[%s4 + $0x8] sm:$0xff]
      %v469 = vld [vmem:[%s4 + $0x10] sm:$0xff]
      %v470 = vld [vmem:[%s4 + $0x18] sm:$0xff]
      %v471 = vld [vmem:[%s4 + $0x20] sm:$0xff]
      %v472 = vld [vmem:[%s4 + $0x28] sm:$0xff]
      %v473 = vld [vmem:[%s4 + $0x30] sm:$0xff]
      %v474 = vld [vmem:[%s4 + $0x38] sm:$0xff]
      %v475 = vld [vmem:[%s4 + $0x40] sm:$0xff]
      %v476 = vld [vmem:[%s4 + $0x48] sm:$0xff]
      %v477 = vld [vmem:[%s4 + $0x50] sm:$0xff]
      %v478 = vld [vmem:[%s4 + $0x58] sm:$0xff]
      %v479 = vld [vmem:[%s4 + $0x60] sm:$0xff]
      %v480 = vld [vmem:[%s4 + $0x68] sm:$0xff]
      %v481 = vld [vmem:[%s4 + $0x70] sm:$0xff]
      %v482 = vld [vmem:[%s4 + $0x78] sm:$0xff]
      %484 = vset.pattern.permute.xlu0 0
      %485 = vperm.xlu0 %484, %v467
      %v486 = vpop.permute.xlu0 %485
      %489 = vset.pattern.permute.xlu0 0
      %490 = vperm.xlu0 %489, %v468
      %v491 = vpop.permute.xlu0 %490
      %494 = vset.pattern.permute.xlu0 0
      %495 = vperm.xlu0 %494, %v469
      %v496 = vpop.permute.xlu0 %495
      %499 = vset.pattern.permute.xlu0 0
      %500 = vperm.xlu0 %499, %v470
      %v501 = vpop.permute.xlu0 %500
      %504 = vset.pattern.permute.xlu0 0
      %505 = vperm.xlu0 %504, %v471
      %v506 = vpop.permute.xlu0 %505
      %509 = vset.pattern.permute.xlu0 0
      %510 = vperm.xlu0 %509, %v472
      %v511 = vpop.permute.xlu0 %510
      %514 = vset.pattern.permute.xlu0 0
      %515 = vperm.xlu0 %514, %v473
      %v516 = vpop.permute.xlu0 %515
      %519 = vset.pattern.permute.xlu0 0
      %520 = vperm.xlu0 %519, %v474
      %v521 = vpop.permute.xlu0 %520
      %524 = vset.pattern.permute.xlu0 0
      %525 = vperm.xlu0 %524, %v475
      %v526 = vpop.permute.xlu0 %525
      %529 = vset.pattern.permute.xlu0 0
      %530 = vperm.xlu0 %529, %v476
      %v531 = vpop.permute.xlu0 %530
      %534 = vset.pattern.permute.xlu0 0
      %535 = vperm.xlu0 %534, %v477
      %v536 = vpop.permute.xlu0 %535
      %539 = vset.pattern.permute.xlu0 0
      %540 = vperm.xlu0 %539, %v478
      %v541 = vpop.permute.xlu0 %540
      %544 = vset.pattern.permute.xlu0 0
      %545 = vperm.xlu0 %544, %v479
      %v546 = vpop.permute.xlu0 %545
      %549 = vset.pattern.permute.xlu0 0
      %550 = vperm.xlu0 %549, %v480
      %v551 = vpop.permute.xlu0 %550
      %554 = vset.pattern.permute.xlu0 0
      %555 = vperm.xlu0 %554, %v481
      %v556 = vpop.permute.xlu0 %555
      %559 = vset.pattern.permute.xlu0 0
      %560 = vperm.xlu0 %559, %v482
      %v561 = vpop.permute.xlu0 %560
      %v563 = vld [vmem:[%s6] sm:$0xff]
      %v564 = vld [vmem:[%s6 + $0x8] sm:$0xff]
      %v565 = vld [vmem:[%s6 + $0x10] sm:$0xff]
      %v566 = vld [vmem:[%s6 + $0x18] sm:$0xff]
      %v567 = vld [vmem:[%s6 + $0x20] sm:$0xff]
      %v568 = vld [vmem:[%s6 + $0x28] sm:$0xff]
      %v569 = vld [vmem:[%s6 + $0x30] sm:$0xff]
      %v570 = vld [vmem:[%s6 + $0x38] sm:$0xff]
      %v571 = vld [vmem:[%s6 + $0x40] sm:$0xff]
      %v572 = vld [vmem:[%s6 + $0x48] sm:$0xff]
      %v573 = vld [vmem:[%s6 + $0x50] sm:$0xff]
      %v574 = vld [vmem:[%s6 + $0x58] sm:$0xff]
      %v575 = vld [vmem:[%s6 + $0x60] sm:$0xff]
      %v576 = vld [vmem:[%s6 + $0x68] sm:$0xff]
      %v577 = vld [vmem:[%s6 + $0x70] sm:$0xff]
      %v578 = vld [vmem:[%s6 + $0x78] sm:$0xff]
      %v579 = vld [vmem:[%s6 + $0x80] sm:$0xff]
      %v580 = vld [vmem:[%s6 + $0x88] sm:$0xff]
      %v581 = vld [vmem:[%s6 + $0x90] sm:$0xff]
      %v582 = vld [vmem:[%s6 + $0x98] sm:$0x1f]
      %584 = vset.pattern.permute.xlu0 0
      %585 = vperm.xlu0 %584, %v563
      %v586 = vpop.permute.xlu0 %585
      %589 = vset.pattern.permute.xlu0 0
      %590 = vperm.xlu0 %589, %v564
      %v591 = vpop.permute.xlu0 %590
      %594 = vset.pattern.permute.xlu0 0
      %595 = vperm.xlu0 %594, %v565
      %v596 = vpop.permute.xlu0 %595
      %599 = vset.pattern.permute.xlu0 0
      %600 = vperm.xlu0 %599, %v566
      %v601 = vpop.permute.xlu0 %600
      %604 = vset.pattern.permute.xlu0 0
      %605 = vperm.xlu0 %604, %v567
      %v606 = vpop.permute.xlu0 %605
      %609 = vset.pattern.permute.xlu0 0
      %610 = vperm.xlu0 %609, %v568
      %v611 = vpop.permute.xlu0 %610
      %614 = vset.pattern.permute.xlu0 0
      %615 = vperm.xlu0 %614, %v569
      %v616 = vpop.permute.xlu0 %615
      %619 = vset.pattern.permute.xlu0 0
      %620 = vperm.xlu0 %619, %v570
      %v621 = vpop.permute.xlu0 %620
      %624 = vset.pattern.permute.xlu0 0
      %625 = vperm.xlu0 %624, %v571
      %v626 = vpop.permute.xlu0 %625
      %629 = vset.pattern.permute.xlu0 0
      %630 = vperm.xlu0 %629, %v572
      %v631 = vpop.permute.xlu0 %630
      %634 = vset.pattern.permute.xlu0 0
      %635 = vperm.xlu0 %634, %v573
      %v636 = vpop.permute.xlu0 %635
      %639 = vset.pattern.permute.xlu0 0
      %640 = vperm.xlu0 %639, %v574
      %v641 = vpop.permute.xlu0 %640
      %644 = vset.pattern.permute.xlu0 0
      %645 = vperm.xlu0 %644, %v575
      %v646 = vpop.permute.xlu0 %645
      %649 = vset.pattern.permute.xlu0 0
      %650 = vperm.xlu0 %649, %v576
      %v651 = vpop.permute.xlu0 %650
      %654 = vset.pattern.permute.xlu0 0
      %655 = vperm.xlu0 %654, %v577
      %v656 = vpop.permute.xlu0 %655
      %659 = vset.pattern.permute.xlu0 0
      %660 = vperm.xlu0 %659, %v578
      %v661 = vpop.permute.xlu0 %660
      %664 = vset.pattern.permute.xlu0 0
      %665 = vperm.xlu0 %664, %v579
      %v666 = vpop.permute.xlu0 %665
      %669 = vset.pattern.permute.xlu0 0
      %670 = vperm.xlu0 %669, %v580
      %v671 = vpop.permute.xlu0 %670
      %674 = vset.pattern.permute.xlu0 0
      %675 = vperm.xlu0 %674, %v581
      %v676 = vpop.permute.xlu0 %675
      %679 = vset.pattern.permute.xlu0 0
      %680 = vperm.xlu0 %679, %v582
      %v681 = vpop.permute.xlu0 %680
      %v683 = vld [vmem:[%s308] ss:$2 sm:$0x3]
      %s684 = scalar_lea.vmem %s308, 4
      %v685 = vld [vmem:[%s684] ss:$2 sm:$0x3]
      %s686 = scalar_lea.vmem %s308, 8
      %v687 = vld [vmem:[%s686] ss:$2 sm:$0x3]
      %s688 = scalar_lea.vmem %s308, 12
      %v689 = vld [vmem:[%s688] ss:$2 sm:$0x3]
      %s690 = scalar_lea.vmem %s308, 16
      %v691 = vld [vmem:[%s690] ss:$2 sm:$0x3]
      %s692 = scalar_lea.vmem %s308, 20
      %v693 = vld [vmem:[%s692] ss:$2 sm:$0x3]
      %s694 = scalar_lea.vmem %s308, 24
      %v695 = vld [vmem:[%s694] ss:$2 sm:$0x3]
      %s696 = scalar_lea.vmem %s308, 28
      %v697 = vld [vmem:[%s696] ss:$2 sm:$0x3]
      %v706 = vperm.slane %v683, 0
      %v707 = vperm.slane %v683, 1
      %v708 = vperm.slane %v685, 0
      %v709 = vperm.slane %v685, 1
      %v710 = vperm.slane %v687, 0
      %v711 = vperm.slane %v687, 1
      %v712 = vperm.slane %v689, 0
      %v713 = vperm.slane %v689, 1
      %v714 = vperm.slane %v691, 0
      %v715 = vperm.slane %v691, 1
      %v716 = vperm.slane %v693, 0
      %v717 = vperm.slane %v693, 1
      %v718 = vperm.slane %v695, 0
      %v719 = vperm.slane %v695, 1
      %v720 = vperm.slane %v697, 0
      %v721 = vperm.slane %v697, 1
      %v738 = vpack.c.bf16 %v706, %v706
      %v739 = vpack.c.bf16 %v707, %v707
      %v740 = vpack.c.bf16 %v708, %v708
      %v741 = vpack.c.bf16 %v709, %v709
      %v742 = vpack.c.bf16 %v710, %v710
      %v743 = vpack.c.bf16 %v711, %v711
      %v744 = vpack.c.bf16 %v712, %v712
      %v745 = vpack.c.bf16 %v713, %v713
      %v746 = vpack.c.bf16 %v714, %v714
      %v747 = vpack.c.bf16 %v715, %v715
      %v748 = vpack.c.bf16 %v716, %v716
      %v749 = vpack.c.bf16 %v717, %v717
      %v750 = vpack.c.bf16 %v718, %v718
      %v751 = vpack.c.bf16 %v719, %v719
      %v752 = vpack.c.bf16 %v720, %v720
      %v753 = vpack.c.bf16 %v721, %v721
      %v770 = vunpack.c.l.b16 %v319
      %v771 = vunpack.c.h.b16 %v319
      %v772 = vunpack.c.l.b16 %v320
      %v773 = vunpack.c.h.b16 %v320
      %v774 = vunpack.c.l.b16 %v321
      %v775 = vunpack.c.h.b16 %v321
      %v776 = vunpack.c.l.b16 %v322
      %v777 = vunpack.c.h.b16 %v322
      %v778 = vunpack.c.l.b16 %v323
      %v779 = vunpack.c.h.b16 %v323
      %v780 = vunpack.c.l.b16 %v324
      %v781 = vunpack.c.h.b16 %v324
      %v782 = vunpack.c.l.b16 %v325
      %v783 = vunpack.c.h.b16 %v325
      %v784 = vunpack.c.l.b16 %v326
      %v785 = vunpack.c.h.b16 %v326
      %v786 = vunpack.c.l.b16 %v327
      %v787 = vunpack.c.h.b16 %v327
      %v788 = vunpack.c.l.b16 %v328
      %v789 = vunpack.c.h.b16 %v328
      %v790 = vunpack.c.l.b16 %v329
      %v791 = vunpack.c.h.b16 %v329
      %v792 = vunpack.c.l.b16 %v330
      %v793 = vunpack.c.h.b16 %v330
      %v794 = vunpack.c.l.b16 %v331
      %v795 = vunpack.c.h.b16 %v331
      %v796 = vunpack.c.l.b16 %v332
      %v797 = vunpack.c.h.b16 %v332
      %v798 = vunpack.c.l.b16 %v333
      %v799 = vunpack.c.h.b16 %v333
      %v800 = vunpack.c.l.b16 %v334
      %v801 = vunpack.c.h.b16 %v334
      %v802 = vpack.c.b16 %v772, %v770
      %v803 = vpack.c.b16 %v773, %v771
      %v804 = vpack.c.b16 %v776, %v774
      %v805 = vpack.c.b16 %v777, %v775
      %v806 = vpack.c.b16 %v780, %v778
      %v807 = vpack.c.b16 %v781, %v779
      %v808 = vpack.c.b16 %v784, %v782
      %v809 = vpack.c.b16 %v785, %v783
      %v810 = vpack.c.b16 %v788, %v786
      %v811 = vpack.c.b16 %v789, %v787
      %v812 = vpack.c.b16 %v792, %v790
      %v813 = vpack.c.b16 %v793, %v791
      %v814 = vpack.c.b16 %v796, %v794
      %v815 = vpack.c.b16 %v797, %v795
      %v816 = vpack.c.b16 %v800, %v798
      %v817 = vpack.c.b16 %v801, %v799
      %v850 = vunpack.c.l.b16 %v738
      %v851 = vunpack.c.l.b16 %v739
      %v852 = vunpack.c.l.b16 %v740
      %v853 = vunpack.c.l.b16 %v741
      %v854 = vunpack.c.l.b16 %v742
      %v855 = vunpack.c.l.b16 %v743
      %v856 = vunpack.c.l.b16 %v744
      %v857 = vunpack.c.l.b16 %v745
      %v858 = vunpack.c.l.b16 %v746
      %v859 = vunpack.c.l.b16 %v747
      %v860 = vunpack.c.l.b16 %v748
      %v861 = vunpack.c.l.b16 %v749
      %v862 = vunpack.c.l.b16 %v750
      %v863 = vunpack.c.l.b16 %v751
      %v864 = vunpack.c.l.b16 %v752
      %v865 = vunpack.c.l.b16 %v753
      %v866 = vrot.slane %v852, 7
      %vm867 = vcmask 1041409
      %v868 = vsel %vm867, %v866, %v850
      %v869 = vrot.slane %v854, 6
      %vm870 = vcmask 1042434
      %v871 = vsel %vm870, %v869, %v868
      %v872 = vrot.slane %v856, 5
      %vm873 = vcmask 1043459
      %v874 = vsel %vm873, %v872, %v871
      %v875 = vrot.slane %v858, 4
      %vm876 = vcmask 1044484
      %v877 = vsel %vm876, %v875, %v874
      %v878 = vrot.slane %v860, 3
      %vm879 = vcmask 1045509
      %v880 = vsel %vm879, %v878, %v877
      %v881 = vrot.slane %v862, 2
      %vm882 = vcmask 1046534
      %v883 = vsel %vm882, %v881, %v880
      %v884 = vrot.slane %v864, 1
      %vm885 = vcmask 1047559
      %v886 = vsel %vm885, %v884, %v883
      %v887 = vrot.slane %v853, 7
      %v888 = vsel %vm867, %v887, %v851
      %v889 = vrot.slane %v855, 6
      %v890 = vsel %vm870, %v889, %v888
      %v891 = vrot.slane %v857, 5
      %v892 = vsel %vm873, %v891, %v890
      %v893 = vrot.slane %v859, 4
      %v894 = vsel %vm876, %v893, %v892
      %v895 = vrot.slane %v861, 3
      %v896 = vsel %vm879, %v895, %v894
      %v897 = vrot.slane %v863, 2
      %v898 = vsel %vm882, %v897, %v896
      %v899 = vrot.slane %v865, 1
      %v900 = vsel %vm885, %v899, %v898
      %v901 = vpack.c.b16 %v886, %v886
      %v902 = vpack.c.b16 %v900, %v900
      %905 = vmatpush.bf16.xpose.msra.mxu0 0
      %906 = vmatpush.bf16.xpose.msra.mxu0 0
      %907 = vmatpush.bf16.xpose.msra.mxu0 0
      %908 = vmatpush.bf16.xpose.msra.mxu0 0
      %909 = vmatpush.bf16.xpose.msra.mxu0 0
      %910 = vmatpush.bf16.xpose.msra.mxu0 0
      %911 = vmatpush.bf16.xpose.msra.mxu0 0
      %912 = vmatpush.bf16.xpose.msra.mxu0 %v901
      %913 = vmatmul.bf16.gmra.mxu0 %v802
      %v914 = vpop.f32.mrf.mxu0
      %v915 = vadd.f32 %v390, %v914
      %v916 = vpop.f32.mrf.mxu0
      %v917 = vadd.f32 %v395, %v916
      %918 = vmatmul.bf16.gmra.mxu0 %v804
      %v919 = vpop.f32.mrf.mxu0
      %v920 = vadd.f32 %v400, %v919
      %v921 = vpop.f32.mrf.mxu0
      %v922 = vadd.f32 %v405, %v921
      %923 = vmatmul.bf16.gmra.mxu0 %v806
      %v924 = vpop.f32.mrf.mxu0
      %v925 = vadd.f32 %v410, %v924
      %v926 = vpop.f32.mrf.mxu0
      %v927 = vadd.f32 %v415, %v926
      %928 = vmatmul.bf16.gmra.mxu0 %v808
      %v929 = vpop.f32.mrf.mxu0
      %v930 = vadd.f32 %v420, %v929
      %v931 = vpop.f32.mrf.mxu0
      %v932 = vadd.f32 %v425, %v931
      %933 = vmatmul.bf16.gmra.mxu0 %v810
      %v934 = vpop.f32.mrf.mxu0
      %v935 = vadd.f32 %v430, %v934
      %v936 = vpop.f32.mrf.mxu0
      %v937 = vadd.f32 %v435, %v936
      %938 = vmatmul.bf16.gmra.mxu0 %v812
      %v939 = vpop.f32.mrf.mxu0
      %v940 = vadd.f32 %v440, %v939
      %v941 = vpop.f32.mrf.mxu0
      %v942 = vadd.f32 %v445, %v941
      %943 = vmatmul.bf16.gmra.mxu0 %v814
      %v944 = vpop.f32.mrf.mxu0
      %v945 = vadd.f32 %v450, %v944
      %v946 = vpop.f32.mrf.mxu0
      %v947 = vadd.f32 %v455, %v946
      %948 = vmatmul.bf16.gmra.mxu0 %v816
      %v949 = vpop.f32.mrf.mxu0
      %v950 = vadd.f32 %v460, %v949
      %v951 = vpop.f32.mrf.mxu0
      %v952 = vadd.f32 %v465, %v951
      %953 = vdwg.mxu0
      %954 = vmatpush.bf16.xpose.msra.mxu0 0
      %955 = vmatpush.bf16.xpose.msra.mxu0 0
      %956 = vmatpush.bf16.xpose.msra.mxu0 0
      %957 = vmatpush.bf16.xpose.msra.mxu0 0
      %958 = vmatpush.bf16.xpose.msra.mxu0 0
      %959 = vmatpush.bf16.xpose.msra.mxu0 0
      %960 = vmatpush.bf16.xpose.msra.mxu0 0
      %961 = vmatpush.bf16.xpose.msra.mxu0 %v902
      %962 = vmatmul.bf16.gmra.mxu0 %v803
      %v963 = vpop.f32.mrf.mxu0
      %v964 = vadd.f32 %v915, %v963
      %v965 = vpop.f32.mrf.mxu0
      %v966 = vadd.f32 %v917, %v965
      %967 = vmatmul.bf16.gmra.mxu0 %v805
      %v968 = vpop.f32.mrf.mxu0
      %v969 = vadd.f32 %v920, %v968
      %v970 = vpop.f32.mrf.mxu0
      %v971 = vadd.f32 %v922, %v970
      %972 = vmatmul.bf16.gmra.mxu0 %v807
      %v973 = vpop.f32.mrf.mxu0
      %v974 = vadd.f32 %v925, %v973
      %v975 = vpop.f32.mrf.mxu0
      %v976 = vadd.f32 %v927, %v975
      %977 = vmatmul.bf16.gmra.mxu0 %v809
      %v978 = vpop.f32.mrf.mxu0
      %v979 = vadd.f32 %v930, %v978
      %v980 = vpop.f32.mrf.mxu0
      %v981 = vadd.f32 %v932, %v980
      %982 = vmatmul.bf16.gmra.mxu0 %v811
      %v983 = vpop.f32.mrf.mxu0
      %v984 = vadd.f32 %v935, %v983
      %v985 = vpop.f32.mrf.mxu0
      %v986 = vadd.f32 %v937, %v985
      %987 = vmatmul.bf16.gmra.mxu0 %v813
      %v988 = vpop.f32.mrf.mxu0
      %v989 = vadd.f32 %v940, %v988
      %v990 = vpop.f32.mrf.mxu0
      %v991 = vadd.f32 %v942, %v990
      %992 = vmatmul.bf16.gmra.mxu0 %v815
      %v993 = vpop.f32.mrf.mxu0
      %v994 = vadd.f32 %v945, %v993
      %v995 = vpop.f32.mrf.mxu0
      %v996 = vadd.f32 %v947, %v995
      %997 = vmatmul.bf16.gmra.mxu0 %v817
      %v998 = vpop.f32.mrf.mxu0
      %v999 = vadd.f32 %v950, %v998
      %v1000 = vpop.f32.mrf.mxu0
      %v1001 = vadd.f32 %v952, %v1000
      %1002 = vdwg.mxu0
      %v1003 = vmax.f32 %v964, 0.0
      %v1004 = vmax.f32 %v966, 0.0
      %v1005 = vmax.f32 %v969, 0.0
      %v1006 = vmax.f32 %v971, 0.0
      %v1007 = vmax.f32 %v974, 0.0
      %v1008 = vmax.f32 %v976, 0.0
      %v1009 = vmax.f32 %v979, 0.0
      %v1010 = vmax.f32 %v981, 0.0
      %v1011 = vmax.f32 %v984, 0.0
      %v1012 = vmax.f32 %v986, 0.0
      %v1013 = vmax.f32 %v989, 0.0
      %v1014 = vmax.f32 %v991, 0.0
      %v1015 = vmax.f32 %v994, 0.0
      %v1016 = vmax.f32 %v996, 0.0
      %v1017 = vmax.f32 %v999, 0.0
      %v1018 = vmax.f32 %v1001, 0.0
      %v1019 = vpack.c.bf16 %v1004, %v1003
      %v1020 = vpack.c.bf16 %v1006, %v1005
      %v1021 = vpack.c.bf16 %v1008, %v1007
      %v1022 = vpack.c.bf16 %v1010, %v1009
      %v1023 = vpack.c.bf16 %v1012, %v1011
      %v1024 = vpack.c.bf16 %v1014, %v1013
      %v1025 = vpack.c.bf16 %v1016, %v1015
      %v1026 = vpack.c.bf16 %v1018, %v1017
      %v1043 = vunpack.c.l.b16 %v335
      %v1044 = vunpack.c.l.b16 %v336
      %v1045 = vunpack.c.l.b16 %v337
      %v1046 = vunpack.c.l.b16 %v338
      %v1047 = vunpack.c.l.b16 %v339
      %v1048 = vunpack.c.l.b16 %v340
      %v1049 = vunpack.c.l.b16 %v341
      %v1050 = vunpack.c.l.b16 %v342
      %v1051 = vunpack.c.l.b16 %v343
      %v1052 = vunpack.c.l.b16 %v344
      %v1053 = vunpack.c.l.b16 %v345
      %v1054 = vunpack.c.l.b16 %v346
      %v1055 = vunpack.c.l.b16 %v347
      %v1056 = vunpack.c.l.b16 %v348
      %v1057 = vunpack.c.l.b16 %v349
      %v1058 = vunpack.c.l.b16 %v350
      %v1059 = vpack.c.b16 %v1044, %v1043
      %v1060 = vpack.c.b16 %v1046, %v1045
      %v1061 = vpack.c.b16 %v1048, %v1047
      %v1062 = vpack.c.b16 %v1050, %v1049
      %v1063 = vpack.c.b16 %v1052, %v1051
      %v1064 = vpack.c.b16 %v1054, %v1053
      %v1065 = vpack.c.b16 %v1056, %v1055
      %v1066 = vpack.c.b16 %v1058, %v1057
      %1075 = vmatpush.bf16.msra.mxu0 %v1026
      %1076 = vmatpush.bf16.msra.mxu0 %v1025
      %1077 = vmatpush.bf16.msra.mxu0 %v1024
      %1078 = vmatpush.bf16.msra.mxu0 %v1023
      %1079 = vmatpush.bf16.msra.mxu0 %v1022
      %1080 = vmatpush.bf16.msra.mxu0 %v1021
      %1081 = vmatpush.bf16.msra.mxu0 %v1020
      %1082 = vmatpush.bf16.msra.mxu0 %v1019
      %1083 = vmatmul.bf16.gmra.mxu0 %v1059
      %v1084 = vpop.f32.mrf.mxu0
      %v1085 = vadd.f32 %v486, %v1084
      %v1086 = vpop.f32.mrf.mxu0
      %v1087 = vadd.f32 %v491, %v1086
      %1088 = vmatmul.bf16.gmra.mxu0 %v1060
      %v1089 = vpop.f32.mrf.mxu0
      %v1090 = vadd.f32 %v496, %v1089
      %v1091 = vpop.f32.mrf.mxu0
      %v1092 = vadd.f32 %v501, %v1091
      %1093 = vmatmul.bf16.gmra.mxu0 %v1061
      %v1094 = vpop.f32.mrf.mxu0
      %v1095 = vadd.f32 %v506, %v1094
      %v1096 = vpop.f32.mrf.mxu0
      %v1097 = vadd.f32 %v511, %v1096
      %1098 = vmatmul.bf16.gmra.mxu0 %v1062
      %v1099 = vpop.f32.mrf.mxu0
      %v1100 = vadd.f32 %v516, %v1099
      %v1101 = vpop.f32.mrf.mxu0
      %v1102 = vadd.f32 %v521, %v1101
      %1103 = vmatmul.bf16.gmra.mxu0 %v1063
      %v1104 = vpop.f32.mrf.mxu0
      %v1105 = vadd.f32 %v526, %v1104
      %v1106 = vpop.f32.mrf.mxu0
      %v1107 = vadd.f32 %v531, %v1106
      %1108 = vmatmul.bf16.gmra.mxu0 %v1064
      %v1109 = vpop.f32.mrf.mxu0
      %v1110 = vadd.f32 %v536, %v1109
      %v1111 = vpop.f32.mrf.mxu0
      %v1112 = vadd.f32 %v541, %v1111
      %1113 = vmatmul.bf16.gmra.mxu0 %v1065
      %v1114 = vpop.f32.mrf.mxu0
      %v1115 = vadd.f32 %v546, %v1114
      %v1116 = vpop.f32.mrf.mxu0
      %v1117 = vadd.f32 %v551, %v1116
      %1118 = vmatmul.bf16.gmra.mxu0 %v1066
      %v1119 = vpop.f32.mrf.mxu0
      %v1120 = vadd.f32 %v556, %v1119
      %v1121 = vpop.f32.mrf.mxu0
      %v1122 = vadd.f32 %v561, %v1121
      %1123 = vdwg.mxu0
      %v1124 = vmax.f32 %v1085, 0.0
      %v1125 = vmax.f32 %v1087, 0.0
      %v1126 = vmax.f32 %v1090, 0.0
      %v1127 = vmax.f32 %v1092, 0.0
      %v1128 = vmax.f32 %v1095, 0.0
      %v1129 = vmax.f32 %v1097, 0.0
      %v1130 = vmax.f32 %v1100, 0.0
      %v1131 = vmax.f32 %v1102, 0.0
      %v1132 = vmax.f32 %v1105, 0.0
      %v1133 = vmax.f32 %v1107, 0.0
      %v1134 = vmax.f32 %v1110, 0.0
      %v1135 = vmax.f32 %v1112, 0.0
      %v1136 = vmax.f32 %v1115, 0.0
      %v1137 = vmax.f32 %v1117, 0.0
      %v1138 = vmax.f32 %v1120, 0.0
      %v1139 = vmax.f32 %v1122, 0.0
      %v1140 = vpack.c.bf16 %v1125, %v1124
      %v1141 = vpack.c.bf16 %v1127, %v1126
      %v1142 = vpack.c.bf16 %v1129, %v1128
      %v1143 = vpack.c.bf16 %v1131, %v1130
      %v1144 = vpack.c.bf16 %v1133, %v1132
      %v1145 = vpack.c.bf16 %v1135, %v1134
      %v1146 = vpack.c.bf16 %v1137, %v1136
      %v1147 = vpack.c.bf16 %v1139, %v1138
      %v1168 = vunpack.c.l.b16 %v351
      %v1169 = vunpack.c.l.b16 %v352
      %v1170 = vunpack.c.l.b16 %v353
      %v1171 = vunpack.c.l.b16 %v354
      %v1172 = vunpack.c.l.b16 %v355
      %v1173 = vunpack.c.l.b16 %v356
      %v1174 = vunpack.c.l.b16 %v357
      %v1175 = vunpack.c.l.b16 %v358
      %v1176 = vunpack.c.l.b16 %v359
      %v1177 = vunpack.c.l.b16 %v360
      %v1178 = vunpack.c.l.b16 %v361
      %v1179 = vunpack.c.l.b16 %v362
      %v1180 = vunpack.c.l.b16 %v363
      %v1181 = vunpack.c.l.b16 %v364
      %v1182 = vunpack.c.l.b16 %v365
      %v1183 = vunpack.c.l.b16 %v366
      %v1184 = vunpack.c.l.b16 %v367
      %v1185 = vunpack.c.l.b16 %v368
      %v1186 = vunpack.c.l.b16 %v369
      %v1187 = vunpack.c.l.b16 %v370
      %v1188 = vpack.c.b16 %v1169, %v1168
      %v1189 = vpack.c.b16 %v1171, %v1170
      %v1190 = vpack.c.b16 %v1173, %v1172
      %v1191 = vpack.c.b16 %v1175, %v1174
      %v1192 = vpack.c.b16 %v1177, %v1176
      %v1193 = vpack.c.b16 %v1179, %v1178
      %v1194 = vpack.c.b16 %v1181, %v1180
      %v1195 = vpack.c.b16 %v1183, %v1182
      %v1196 = vpack.c.b16 %v1185, %v1184
      %v1197 = vpack.c.b16 %v1187, %v1186
      %1208 = vmatpush.bf16.msra.mxu0 %v1147
      %1209 = vmatpush.bf16.msra.mxu0 %v1146
      %1210 = vmatpush.bf16.msra.mxu0 %v1145
      %1211 = vmatpush.bf16.msra.mxu0 %v1144
      %1212 = vmatpush.bf16.msra.mxu0 %v1143
      %1213 = vmatpush.bf16.msra.mxu0 %v1142
      %1214 = vmatpush.bf16.msra.mxu0 %v1141
      %1215 = vmatpush.bf16.msra.mxu0 %v1140
      %1216 = vmatmul.bf16.gmra.mxu0 %v1188
      %v1217 = vpop.f32.mrf.mxu0
      %v1218 = vadd.f32 %v586, %v1217
      %v1219 = vpop.f32.mrf.mxu0
      %v1220 = vadd.f32 %v591, %v1219
      %1221 = vmatmul.bf16.gmra.mxu0 %v1189
      %v1222 = vpop.f32.mrf.mxu0
      %v1223 = vadd.f32 %v596, %v1222
      %v1224 = vpop.f32.mrf.mxu0
      %v1225 = vadd.f32 %v601, %v1224
      %1226 = vmatmul.bf16.gmra.mxu0 %v1190
      %v1227 = vpop.f32.mrf.mxu0
      %v1228 = vadd.f32 %v606, %v1227
      %v1229 = vpop.f32.mrf.mxu0
      %v1230 = vadd.f32 %v611, %v1229
      %1231 = vmatmul.bf16.gmra.mxu0 %v1191
      %v1232 = vpop.f32.mrf.mxu0
      %v1233 = vadd.f32 %v616, %v1232
      %v1234 = vpop.f32.mrf.mxu0
      %v1235 = vadd.f32 %v621, %v1234
      %1236 = vmatmul.bf16.gmra.mxu0 %v1192
      %v1237 = vpop.f32.mrf.mxu0
      %v1238 = vadd.f32 %v626, %v1237
      %v1239 = vpop.f32.mrf.mxu0
      %v1240 = vadd.f32 %v631, %v1239
      %1241 = vmatmul.bf16.gmra.mxu0 %v1193
      %v1242 = vpop.f32.mrf.mxu0
      %v1243 = vadd.f32 %v636, %v1242
      %v1244 = vpop.f32.mrf.mxu0
      %v1245 = vadd.f32 %v641, %v1244
      %1246 = vmatmul.bf16.gmra.mxu0 %v1194
      %v1247 = vpop.f32.mrf.mxu0
      %v1248 = vadd.f32 %v646, %v1247
      %v1249 = vpop.f32.mrf.mxu0
      %v1250 = vadd.f32 %v651, %v1249
      %1251 = vmatmul.bf16.gmra.mxu0 %v1195
      %v1252 = vpop.f32.mrf.mxu0
      %v1253 = vadd.f32 %v656, %v1252
      %v1254 = vpop.f32.mrf.mxu0
      %v1255 = vadd.f32 %v661, %v1254
      %1256 = vmatmul.bf16.gmra.mxu0 %v1196
      %v1257 = vpop.f32.mrf.mxu0
      %v1258 = vadd.f32 %v666, %v1257
      %v1259 = vpop.f32.mrf.mxu0
      %v1260 = vadd.f32 %v671, %v1259
      %1261 = vmatmul.bf16.gmra.mxu0 %v1197
      %v1262 = vpop.f32.mrf.mxu0
      %v1263 = vadd.f32 %v676, %v1262
      %v1264 = vpop.f32.mrf.mxu0
      %v1265 = vadd.f32 %v681, %v1264
      %1266 = vdwg.mxu0
      %vm1267 = vcmask 64512
      %1268 = vst.msk [vmem:[%s317] sm:$0xff] %vm1267, %v1218
      %1269 = vst.msk [vmem:[%s317 + $0x8] sm:$0xff] %vm1267, %v1220
      %1270 = vst.msk [vmem:[%s317 + $0x10] sm:$0xff] %vm1267, %v1223
      %1271 = vst.msk [vmem:[%s317 + $0x18] sm:$0xff] %vm1267, %v1225
      %1272 = vst.msk [vmem:[%s317 + $0x20] sm:$0xff] %vm1267, %v1228
      %1273 = vst.msk [vmem:[%s317 + $0x28] sm:$0xff] %vm1267, %v1230
      %1274 = vst.msk [vmem:[%s317 + $0x30] sm:$0xff] %vm1267, %v1233
      %1275 = vst.msk [vmem:[%s317 + $0x38] sm:$0xff] %vm1267, %v1235
      %1276 = vst.msk [vmem:[%s317 + $0x40] sm:$0xff] %vm1267, %v1238
      %1277 = vst.msk [vmem:[%s317 + $0x48] sm:$0xff] %vm1267, %v1240
      %1278 = vst.msk [vmem:[%s317 + $0x50] sm:$0xff] %vm1267, %v1243
      %1279 = vst.msk [vmem:[%s317 + $0x58] sm:$0xff] %vm1267, %v1245
      %1280 = vst.msk [vmem:[%s317 + $0x60] sm:$0xff] %vm1267, %v1248
      %1281 = vst.msk [vmem:[%s317 + $0x68] sm:$0xff] %vm1267, %v1250
      %1282 = vst.msk [vmem:[%s317 + $0x70] sm:$0xff] %vm1267, %v1253
      %1283 = vst.msk [vmem:[%s317 + $0x78] sm:$0xff] %vm1267, %v1255
      %1284 = vst.msk [vmem:[%s317 + $0x80] sm:$0xff] %vm1267, %v1258
      %1285 = vst.msk [vmem:[%s317 + $0x88] sm:$0xff] %vm1267, %v1260
      %1286 = vst.msk [vmem:[%s317 + $0x90] sm:$0xff] %vm1267, %v1263
      %vm1287 = vcmask 61440
      %1288 = vst.msk [vmem:[%s317 + $0x98] sm:$0x1f] %vm1287, %v1265
      %s1289 = scalar_lea.vmem %s308, 1
      %v1290 = vld [vmem:[%s1289] ss:$2 sm:$0x3]
      %s1291 = scalar_lea.vmem %s308, 5
      %v1292 = vld [vmem:[%s1291] ss:$2 sm:$0x3]
      %s1293 = scalar_lea.vmem %s308, 9
      %v1294 = vld [vmem:[%s1293] ss:$2 sm:$0x3]
      %s1295 = scalar_lea.vmem %s308, 13
      %v1296 = vld [vmem:[%s1295] ss:$2 sm:$0x3]
      %s1297 = scalar_lea.vmem %s308, 17
      %v1298 = vld [vmem:[%s1297] ss:$2 sm:$0x3]
      %s1299 = scalar_lea.vmem %s308, 21
      %v1300 = vld [vmem:[%s1299] ss:$2 sm:$0x3]
      %s1301 = scalar_lea.vmem %s308, 25
      %v1302 = vld [vmem:[%s1301] ss:$2 sm:$0x3]
      %s1303 = scalar_lea.vmem %s308, 29
      %v1304 = vld [vmem:[%s1303] ss:$2 sm:$0x3]
      %v1313 = vperm.slane %v1290, 0
      %v1314 = vperm.slane %v1290, 1
      %v1315 = vperm.slane %v1292, 0
      %v1316 = vperm.slane %v1292, 1
      %v1317 = vperm.slane %v1294, 0
      %v1318 = vperm.slane %v1294, 1
      %v1319 = vperm.slane %v1296, 0
      %v1320 = vperm.slane %v1296, 1
      %v1321 = vperm.slane %v1298, 0
      %v1322 = vperm.slane %v1298, 1
      %v1323 = vperm.slane %v1300, 0
      %v1324 = vperm.slane %v1300, 1
      %v1325 = vperm.slane %v1302, 0
      %v1326 = vperm.slane %v1302, 1
      %v1327 = vperm.slane %v1304, 0
      %v1328 = vperm.slane %v1304, 1
      %v1345 = vpack.c.bf16 %v1313, %v1313
      %v1346 = vpack.c.bf16 %v1314, %v1314
      %v1347 = vpack.c.bf16 %v1315, %v1315
      %v1348 = vpack.c.bf16 %v1316, %v1316
      %v1349 = vpack.c.bf16 %v1317, %v1317
      %v1350 = vpack.c.bf16 %v1318, %v1318
      %v1351 = vpack.c.bf16 %v1319, %v1319
      %v1352 = vpack.c.bf16 %v1320, %v1320
      %v1353 = vpack.c.bf16 %v1321, %v1321
      %v1354 = vpack.c.bf16 %v1322, %v1322
      %v1355 = vpack.c.bf16 %v1323, %v1323
      %v1356 = vpack.c.bf16 %v1324, %v1324
      %v1357 = vpack.c.bf16 %v1325, %v1325
      %v1358 = vpack.c.bf16 %v1326, %v1326
      %v1359 = vpack.c.bf16 %v1327, %v1327
      %v1360 = vpack.c.bf16 %v1328, %v1328
      %v1377 = vunpack.c.l.b16 %v1345
      %v1378 = vunpack.c.l.b16 %v1346
      %v1379 = vunpack.c.l.b16 %v1347
      %v1380 = vunpack.c.l.b16 %v1348
      %v1381 = vunpack.c.l.b16 %v1349
      %v1382 = vunpack.c.l.b16 %v1350
      %v1383 = vunpack.c.l.b16 %v1351
      %v1384 = vunpack.c.l.b16 %v1352
      %v1385 = vunpack.c.l.b16 %v1353
      %v1386 = vunpack.c.l.b16 %v1354
      %v1387 = vunpack.c.l.b16 %v1355
      %v1388 = vunpack.c.l.b16 %v1356
      %v1389 = vunpack.c.l.b16 %v1357
      %v1390 = vunpack.c.l.b16 %v1358
      %v1391 = vunpack.c.l.b16 %v1359
      %v1392 = vunpack.c.l.b16 %v1360
      %v1393 = vrot.slane %v1379, 7
      %v1394 = vsel %vm867, %v1393, %v1377
      %v1395 = vrot.slane %v1381, 6
      %v1396 = vsel %vm870, %v1395, %v1394
      %v1397 = vrot.slane %v1383, 5
      %v1398 = vsel %vm873, %v1397, %v1396
      %v1399 = vrot.slane %v1385, 4
      %v1400 = vsel %vm876, %v1399, %v1398
      %v1401 = vrot.slane %v1387, 3
      %v1402 = vsel %vm879, %v1401, %v1400
      %v1403 = vrot.slane %v1389, 2
      %v1404 = vsel %vm882, %v1403, %v1402
      %v1405 = vrot.slane %v1391, 1
      %v1406 = vsel %vm885, %v1405, %v1404
      %v1407 = vrot.slane %v1380, 7
      %v1408 = vsel %vm867, %v1407, %v1378
      %v1409 = vrot.slane %v1382, 6
      %v1410 = vsel %vm870, %v1409, %v1408
      %v1411 = vrot.slane %v1384, 5
      %v1412 = vsel %vm873, %v1411, %v1410
      %v1413 = vrot.slane %v1386, 4
      %v1414 = vsel %vm876, %v1413, %v1412
      %v1415 = vrot.slane %v1388, 3
      %v1416 = vsel %vm879, %v1415, %v1414
      %v1417 = vrot.slane %v1390, 2
      %v1418 = vsel %vm882, %v1417, %v1416
      %v1419 = vrot.slane %v1392, 1
      %v1420 = vsel %vm885, %v1419, %v1418
      %v1421 = vpack.c.b16 %v1406, %v1406
      %v1422 = vpack.c.b16 %v1420, %v1420
      %1425 = vmatpush.bf16.xpose.msra.mxu0 0
      %1426 = vmatpush.bf16.xpose.msra.mxu0 0
      %1427 = vmatpush.bf16.xpose.msra.mxu0 0
      %1428 = vmatpush.bf16.xpose.msra.mxu0 0
      %1429 = vmatpush.bf16.xpose.msra.mxu0 0
      %1430 = vmatpush.bf16.xpose.msra.mxu0 0
      %1431 = vmatpush.bf16.xpose.msra.mxu0 0
      %1432 = vmatpush.bf16.xpose.msra.mxu0 %v1421
      %1433 = vmatmul.bf16.gmra.mxu0 %v802
      %v1434 = vpop.f32.mrf.mxu0
      %v1435 = vadd.f32 %v390, %v1434
      %v1436 = vpop.f32.mrf.mxu0
      %v1437 = vadd.f32 %v395, %v1436
      %1438 = vmatmul.bf16.gmra.mxu0 %v804
      %v1439 = vpop.f32.mrf.mxu0
      %v1440 = vadd.f32 %v400, %v1439
      %v1441 = vpop.f32.mrf.mxu0
      %v1442 = vadd.f32 %v405, %v1441
      %1443 = vmatmul.bf16.gmra.mxu0 %v806
      %v1444 = vpop.f32.mrf.mxu0
      %v1445 = vadd.f32 %v410, %v1444
      %v1446 = vpop.f32.mrf.mxu0
      %v1447 = vadd.f32 %v415, %v1446
      %1448 = vmatmul.bf16.gmra.mxu0 %v808
      %v1449 = vpop.f32.mrf.mxu0
      %v1450 = vadd.f32 %v420, %v1449
      %v1451 = vpop.f32.mrf.mxu0
      %v1452 = vadd.f32 %v425, %v1451
      %1453 = vmatmul.bf16.gmra.mxu0 %v810
      %v1454 = vpop.f32.mrf.mxu0
      %v1455 = vadd.f32 %v430, %v1454
      %v1456 = vpop.f32.mrf.mxu0
      %v1457 = vadd.f32 %v435, %v1456
      %1458 = vmatmul.bf16.gmra.mxu0 %v812
      %v1459 = vpop.f32.mrf.mxu0
      %v1460 = vadd.f32 %v440, %v1459
      %v1461 = vpop.f32.mrf.mxu0
      %v1462 = vadd.f32 %v445, %v1461
      %1463 = vmatmul.bf16.gmra.mxu0 %v814
      %v1464 = vpop.f32.mrf.mxu0
      %v1465 = vadd.f32 %v450, %v1464
      %v1466 = vpop.f32.mrf.mxu0
      %v1467 = vadd.f32 %v455, %v1466
      %1468 = vmatmul.bf16.gmra.mxu0 %v816
      %v1469 = vpop.f32.mrf.mxu0
      %v1470 = vadd.f32 %v460, %v1469
      %v1471 = vpop.f32.mrf.mxu0
      %v1472 = vadd.f32 %v465, %v1471
      %1473 = vdwg.mxu0
      %1474 = vmatpush.bf16.xpose.msra.mxu0 0
      %1475 = vmatpush.bf16.xpose.msra.mxu0 0
      %1476 = vmatpush.bf16.xpose.msra.mxu0 0
      %1477 = vmatpush.bf16.xpose.msra.mxu0 0
      %1478 = vmatpush.bf16.xpose.msra.mxu0 0
      %1479 = vmatpush.bf16.xpose.msra.mxu0 0
      %1480 = vmatpush.bf16.xpose.msra.mxu0 0
      %1481 = vmatpush.bf16.xpose.msra.mxu0 %v1422
      %1482 = vmatmul.bf16.gmra.mxu0 %v803
      %v1483 = vpop.f32.mrf.mxu0
      %v1484 = vadd.f32 %v1435, %v1483
      %v1485 = vpop.f32.mrf.mxu0
      %v1486 = vadd.f32 %v1437, %v1485
      %1487 = vmatmul.bf16.gmra.mxu0 %v805
      %v1488 = vpop.f32.mrf.mxu0
      %v1489 = vadd.f32 %v1440, %v1488
      %v1490 = vpop.f32.mrf.mxu0
      %v1491 = vadd.f32 %v1442, %v1490
      %1492 = vmatmul.bf16.gmra.mxu0 %v807
      %v1493 = vpop.f32.mrf.mxu0
      %v1494 = vadd.f32 %v1445, %v1493
      %v1495 = vpop.f32.mrf.mxu0
      %v1496 = vadd.f32 %v1447, %v1495
      %1497 = vmatmul.bf16.gmra.mxu0 %v809
      %v1498 = vpop.f32.mrf.mxu0
      %v1499 = vadd.f32 %v1450, %v1498
      %v1500 = vpop.f32.mrf.mxu0
      %v1501 = vadd.f32 %v1452, %v1500
      %1502 = vmatmul.bf16.gmra.mxu0 %v811
      %v1503 = vpop.f32.mrf.mxu0
      %v1504 = vadd.f32 %v1455, %v1503
      %v1505 = vpop.f32.mrf.mxu0
      %v1506 = vadd.f32 %v1457, %v1505
      %1507 = vmatmul.bf16.gmra.mxu0 %v813
      %v1508 = vpop.f32.mrf.mxu0
      %v1509 = vadd.f32 %v1460, %v1508
      %v1510 = vpop.f32.mrf.mxu0
      %v1511 = vadd.f32 %v1462, %v1510
      %1512 = vmatmul.bf16.gmra.mxu0 %v815
      %v1513 = vpop.f32.mrf.mxu0
      %v1514 = vadd.f32 %v1465, %v1513
      %v1515 = vpop.f32.mrf.mxu0
      %v1516 = vadd.f32 %v1467, %v1515
      %1517 = vmatmul.bf16.gmra.mxu0 %v817
      %v1518 = vpop.f32.mrf.mxu0
      %v1519 = vadd.f32 %v1470, %v1518
      %v1520 = vpop.f32.mrf.mxu0
      %v1521 = vadd.f32 %v1472, %v1520
      %1522 = vdwg.mxu0
      %v1523 = vmax.f32 %v1484, 0.0
      %v1524 = vmax.f32 %v1486, 0.0
      %v1525 = vmax.f32 %v1489, 0.0
      %v1526 = vmax.f32 %v1491, 0.0
      %v1527 = vmax.f32 %v1494, 0.0
      %v1528 = vmax.f32 %v1496, 0.0
      %v1529 = vmax.f32 %v1499, 0.0
      %v1530 = vmax.f32 %v1501, 0.0
      %v1531 = vmax.f32 %v1504, 0.0
      %v1532 = vmax.f32 %v1506, 0.0
      %v1533 = vmax.f32 %v1509, 0.0
      %v1534 = vmax.f32 %v1511, 0.0
      %v1535 = vmax.f32 %v1514, 0.0
      %v1536 = vmax.f32 %v1516, 0.0
      %v1537 = vmax.f32 %v1519, 0.0
      %v1538 = vmax.f32 %v1521, 0.0
      %v1539 = vpack.c.bf16 %v1524, %v1523
      %v1540 = vpack.c.bf16 %v1526, %v1525
      %v1541 = vpack.c.bf16 %v1528, %v1527
      %v1542 = vpack.c.bf16 %v1530, %v1529
      %v1543 = vpack.c.bf16 %v1532, %v1531
      %v1544 = vpack.c.bf16 %v1534, %v1533
      %v1545 = vpack.c.bf16 %v1536, %v1535
      %v1546 = vpack.c.bf16 %v1538, %v1537
      %1547 = vmatpush.bf16.msra.mxu0 %v1546
      %1548 = vmatpush.bf16.msra.mxu0 %v1545
      %1549 = vmatpush.bf16.msra.mxu0 %v1544
      %1550 = vmatpush.bf16.msra.mxu0 %v1543
      %1551 = vmatpush.bf16.msra.mxu0 %v1542
      %1552 = vmatpush.bf16.msra.mxu0 %v1541
      %1553 = vmatpush.bf16.msra.mxu0 %v1540
      %1554 = vmatpush.bf16.msra.mxu0 %v1539
      %1555 = vmatmul.bf16.gmra.mxu0 %v1059
      %v1556 = vpop.f32.mrf.mxu0
      %v1557 = vadd.f32 %v486, %v1556
      %v1558 = vpop.f32.mrf.mxu0
      %v1559 = vadd.f32 %v491, %v1558
      %1560 = vmatmul.bf16.gmra.mxu0 %v1060
      %v1561 = vpop.f32.mrf.mxu0
      %v1562 = vadd.f32 %v496, %v1561
      %v1563 = vpop.f32.mrf.mxu0
      %v1564 = vadd.f32 %v501, %v1563
      %1565 = vmatmul.bf16.gmra.mxu0 %v1061
      %v1566 = vpop.f32.mrf.mxu0
      %v1567 = vadd.f32 %v506, %v1566
      %v1568 = vpop.f32.mrf.mxu0
      %v1569 = vadd.f32 %v511, %v1568
      %1570 = vmatmul.bf16.gmra.mxu0 %v1062
      %v1571 = vpop.f32.mrf.mxu0
      %v1572 = vadd.f32 %v516, %v1571
      %v1573 = vpop.f32.mrf.mxu0
      %v1574 = vadd.f32 %v521, %v1573
      %1575 = vmatmul.bf16.gmra.mxu0 %v1063
      %v1576 = vpop.f32.mrf.mxu0
      %v1577 = vadd.f32 %v526, %v1576
      %v1578 = vpop.f32.mrf.mxu0
      %v1579 = vadd.f32 %v531, %v1578
      %1580 = vmatmul.bf16.gmra.mxu0 %v1064
      %v1581 = vpop.f32.mrf.mxu0
      %v1582 = vadd.f32 %v536, %v1581
      %v1583 = vpop.f32.mrf.mxu0
      %v1584 = vadd.f32 %v541, %v1583
      %1585 = vmatmul.bf16.gmra.mxu0 %v1065
      %v1586 = vpop.f32.mrf.mxu0
      %v1587 = vadd.f32 %v546, %v1586
      %v1588 = vpop.f32.mrf.mxu0
      %v1589 = vadd.f32 %v551, %v1588
      %1590 = vmatmul.bf16.gmra.mxu0 %v1066
      %v1591 = vpop.f32.mrf.mxu0
      %v1592 = vadd.f32 %v556, %v1591
      %v1593 = vpop.f32.mrf.mxu0
      %v1594 = vadd.f32 %v561, %v1593
      %1595 = vdwg.mxu0
      %v1596 = vmax.f32 %v1557, 0.0
      %v1597 = vmax.f32 %v1559, 0.0
      %v1598 = vmax.f32 %v1562, 0.0
      %v1599 = vmax.f32 %v1564, 0.0
      %v1600 = vmax.f32 %v1567, 0.0
      %v1601 = vmax.f32 %v1569, 0.0
      %v1602 = vmax.f32 %v1572, 0.0
      %v1603 = vmax.f32 %v1574, 0.0
      %v1604 = vmax.f32 %v1577, 0.0
      %v1605 = vmax.f32 %v1579, 0.0
      %v1606 = vmax.f32 %v1582, 0.0
      %v1607 = vmax.f32 %v1584, 0.0
      %v1608 = vmax.f32 %v1587, 0.0
      %v1609 = vmax.f32 %v1589, 0.0
      %v1610 = vmax.f32 %v1592, 0.0
      %v1611 = vmax.f32 %v1594, 0.0
      %v1612 = vpack.c.bf16 %v1597, %v1596
      %v1613 = vpack.c.bf16 %v1599, %v1598
      %v1614 = vpack.c.bf16 %v1601, %v1600
      %v1615 = vpack.c.bf16 %v1603, %v1602
      %v1616 = vpack.c.bf16 %v1605, %v1604
      %v1617 = vpack.c.bf16 %v1607, %v1606
      %v1618 = vpack.c.bf16 %v1609, %v1608
      %v1619 = vpack.c.bf16 %v1611, %v1610
      %1620 = vmatpush.bf16.msra.mxu0 %v1619
      %1621 = vmatpush.bf16.msra.mxu0 %v1618
      %1622 = vmatpush.bf16.msra.mxu0 %v1617
      %1623 = vmatpush.bf16.msra.mxu0 %v1616
      %1624 = vmatpush.bf16.msra.mxu0 %v1615
      %1625 = vmatpush.bf16.msra.mxu0 %v1614
      %1626 = vmatpush.bf16.msra.mxu0 %v1613
      %1627 = vmatpush.bf16.msra.mxu0 %v1612
      %1628 = vmatmul.bf16.gmra.mxu0 %v1188
      %v1629 = vpop.f32.mrf.mxu0
      %v1630 = vadd.f32 %v586, %v1629
      %v1631 = vpop.f32.mrf.mxu0
      %v1632 = vadd.f32 %v591, %v1631
      %1633 = vmatmul.bf16.gmra.mxu0 %v1189
      %v1634 = vpop.f32.mrf.mxu0
      %v1635 = vadd.f32 %v596, %v1634
      %v1636 = vpop.f32.mrf.mxu0
      %v1637 = vadd.f32 %v601, %v1636
      %1638 = vmatmul.bf16.gmra.mxu0 %v1190
      %v1639 = vpop.f32.mrf.mxu0
      %v1640 = vadd.f32 %v606, %v1639
      %v1641 = vpop.f32.mrf.mxu0
      %v1642 = vadd.f32 %v611, %v1641
      %1643 = vmatmul.bf16.gmra.mxu0 %v1191
      %v1644 = vpop.f32.mrf.mxu0
      %v1645 = vadd.f32 %v616, %v1644
      %v1646 = vpop.f32.mrf.mxu0
      %v1647 = vadd.f32 %v621, %v1646
      %1648 = vmatmul.bf16.gmra.mxu0 %v1192
      %v1649 = vpop.f32.mrf.mxu0
      %v1650 = vadd.f32 %v626, %v1649
      %v1651 = vpop.f32.mrf.mxu0
      %v1652 = vadd.f32 %v631, %v1651
      %1653 = vmatmul.bf16.gmra.mxu0 %v1193
      %v1654 = vpop.f32.mrf.mxu0
      %v1655 = vadd.f32 %v636, %v1654
      %v1656 = vpop.f32.mrf.mxu0
      %v1657 = vadd.f32 %v641, %v1656
      %1658 = vmatmul.bf16.gmra.mxu0 %v1194
      %v1659 = vpop.f32.mrf.mxu0
      %v1660 = vadd.f32 %v646, %v1659
      %v1661 = vpop.f32.mrf.mxu0
      %v1662 = vadd.f32 %v651, %v1661
      %1663 = vmatmul.bf16.gmra.mxu0 %v1195
      %v1664 = vpop.f32.mrf.mxu0
      %v1665 = vadd.f32 %v656, %v1664
      %v1666 = vpop.f32.mrf.mxu0
      %v1667 = vadd.f32 %v661, %v1666
      %1668 = vmatmul.bf16.gmra.mxu0 %v1196
      %v1669 = vpop.f32.mrf.mxu0
      %v1670 = vadd.f32 %v666, %v1669
      %v1671 = vpop.f32.mrf.mxu0
      %v1672 = vadd.f32 %v671, %v1671
      %1673 = vmatmul.bf16.gmra.mxu0 %v1197
      %v1674 = vpop.f32.mrf.mxu0
      %v1675 = vadd.f32 %v676, %v1674
      %v1676 = vpop.f32.mrf.mxu0
      %v1677 = vadd.f32 %v681, %v1676
      %1678 = vdwg.mxu0
      %s1679 = scalar_lea.vmem %s317, 160
      %1680 = vst.msk [vmem:[%s1679] sm:$0xff] %vm1267, %v1630
      %1681 = vst.msk [vmem:[%s1679 + $0x8] sm:$0xff] %vm1267, %v1632
      %1682 = vst.msk [vmem:[%s1679 + $0x10] sm:$0xff] %vm1267, %v1635
      %1683 = vst.msk [vmem:[%s1679 + $0x18] sm:$0xff] %vm1267, %v1637
      %1684 = vst.msk [vmem:[%s1679 + $0x20] sm:$0xff] %vm1267, %v1640
      %1685 = vst.msk [vmem:[%s1679 + $0x28] sm:$0xff] %vm1267, %v1642
      %1686 = vst.msk [vmem:[%s1679 + $0x30] sm:$0xff] %vm1267, %v1645
      %1687 = vst.msk [vmem:[%s1679 + $0x38] sm:$0xff] %vm1267, %v1647
      %1688 = vst.msk [vmem:[%s1679 + $0x40] sm:$0xff] %vm1267, %v1650
      %1689 = vst.msk [vmem:[%s1679 + $0x48] sm:$0xff] %vm1267, %v1652
      %1690 = vst.msk [vmem:[%s1679 + $0x50] sm:$0xff] %vm1267, %v1655
      %1691 = vst.msk [vmem:[%s1679 + $0x58] sm:$0xff] %vm1267, %v1657
      %1692 = vst.msk [vmem:[%s1679 + $0x60] sm:$0xff] %vm1267, %v1660
      %1693 = vst.msk [vmem:[%s1679 + $0x68] sm:$0xff] %vm1267, %v1662
      %1694 = vst.msk [vmem:[%s1679 + $0x70] sm:$0xff] %vm1267, %v1665
      %1695 = vst.msk [vmem:[%s1679 + $0x78] sm:$0xff] %vm1267, %v1667
      %1696 = vst.msk [vmem:[%s1679 + $0x80] sm:$0xff] %vm1267, %v1670
      %1697 = vst.msk [vmem:[%s1679 + $0x88] sm:$0xff] %vm1267, %v1672
      %1698 = vst.msk [vmem:[%s1679 + $0x90] sm:$0xff] %vm1267, %v1675
      %1699 = vst.msk [vmem:[%s1679 + $0x98] sm:$0x1f] %vm1287, %v1677
      %p1700 = scmp.lt.s32.totalorder %s22, 1
      %s1701 = scalar_select %p1700, %s22, 1
      %p1702 = scmp.lt.s32.totalorder %s23, 0
      %s1703 = scalar_select %p1702, %s23, 0
      %s1704 = smul.addr %s1701, 40
      %s1705 = sadd.s32 %s1703, %s1704
      %s1706 = smul.addr %s1705, 8
      %s1707 = scalar_lea.vmem %s7, %s1706
      // Predicated region
      $region49: #{tpu_custom_call.1} parent=47 // pred_check
        %p1708 = pneg %p204
      $region50: #{tpu_custom_call.1} parent=47 // pred_check_branch
        %1710 = sbr.rel (%p1708) target = $region52
      $region51: #{tpu_custom_call.1} parent=47 // pred_region
        _
      $region52: #{tpu_custom_call.1} parent=47 // pred_fallthru
        _
    $region48: #{tpu_custom_call.1} parent=5 // pred_fallthru
      _
    %p1711 = scmp.le.s32.totalorder 2, %s13
    // Predicated region
    $region53: #{tpu_custom_call.1} parent=5 // pred_check
      %p1712 = pneg %p1711
    $region54: #{tpu_custom_call.1} parent=5 // pred_check_branch
      %1714 = sbr.rel (%p1712) target = $region56
    $region55: #{tpu_custom_call.1} parent=5 // pred_region
      %s1715 = ssub.s32 %s13, 2
      // Predicated region
      $region57: #{tpu_custom_call.1} parent=55 // pred_check
        %p1716 = pneg %p210
      $region58: #{tpu_custom_call.1} parent=55 // pred_check_branch
        %1718 = sbr.rel (%p1716) target = $region60
      $region59: #{tpu_custom_call.1} parent=55 // pred_region
        %p1719 = scmp.lt.s32.totalorder %s24, 1
        %s1720 = scalar_select %p1719, %s24, 1
        %p1721 = scmp.lt.s32.totalorder %s25, 0
        %s1722 = scalar_select %p1721, %s25, 0
        %s1723 = smul.addr %s1720, 40
        %s1724 = sadd.s32 %s1722, %s1723
        %s1725 = smul.addr %s1724, 8
        %s1726 = scalar_lea.vmem %s7, %s1725
      $region60: #{tpu_custom_call.1} parent=55 // pred_fallthru
        _
    $region56: #{tpu_custom_call.1} parent=5 // pred_fallthru
      _
  $region6: #{tpu_custom_call.1} parent=0 // loop_footer
    %s17 = sadd.s32 1, %s13
  $region7: #{tpu_custom_call.1} parent=0 // loop_footer_branch
    %12 = sbr.rel target = $region3
  $region8: #{tpu_custom_call.1} parent=0 // loop_exit
    _

</llo_original>
